<compile_context>
chip_gen: v6e
topology: v6e:2x2x1
jax: 0.10.0
libtpu: 0.0.40
codegen_flags: <defaults>
</compile_context>

<pallas_src>
import functools

import jax
import jax.numpy as jnp
from jax.experimental import pallas as pl
from jax.experimental.pallas import tpu as pltpu


def _vmem_budget_bytes():
    """Generation-aware VMEM budget (v7x: 64 MiB/TC, v5e/v6e: 128 MiB)."""
    try:
        info = pltpu.get_tpu_info()
        cap = getattr(info, "vmem_capacity_bytes", None)
        if cap:
            return int(min(cap * 3 // 4, 100 * 1024 * 1024))
    except Exception:
        pass
    return 48 * 1024 * 1024


def _volume_sample_kernel(pts_ref, grid_ref, out_ref, *, D, H, W, Cp,
                          ax, bx, ay, by, az, bz):
    # pts_ref : (3, TN)          query points, rows = (x, y, z); TN on lanes
    # grid_ref: (H*W*Cp, D)      volume re-laid-out so D is the matmul contraction dim
    #                            and rows are ordered (h, w, c) with c padded to Cp|8
    # out_ref : (Cp, TN)         transposed output tile (lane-dense along TN)
    TN = pts_ref.shape[1]

    # Un-normalize (box mapping + align_corners) fused into one affine per axis.
    gx = pts_ref[0:1, :] * ax + bx          # (1, TN) -> W axis
    gy = pts_ref[1:2, :] * ay + by          # (1, TN) -> H axis
    gz = pts_ref[2:3, :] * az + bz          # (1, TN) -> D axis

    # Per-axis trilinear (tent) weights for the D axis; out-of-range voxels get
    # exactly 0 weight => 'zeros' padding.
    iz = jax.lax.broadcasted_iota(jnp.int32, (D, TN), 0).astype(jnp.float32)
    tz = jnp.maximum(0.0, 1.0 - jnp.abs(gz - iz))                        # (D, TN)

    # Contract the D axis on the MXU: (H*W*Cp, D) @ (D, TN) -> (H*W*Cp, TN).
    g1 = jnp.dot(grid_ref[...], tz, preferred_element_type=jnp.float32)

    # Fold H with H small multiply-accumulates over 8-aligned (W*Cp, TN) slices.
    WC = W * Cp

    def ty_row(h):
        return jnp.maximum(0.0, 1.0 - jnp.abs(gy - float(h)))           # (1, TN)

    accy = g1[0:WC, :] * ty_row(0)
    for h in range(1, H):
        accy = accy + g1[h * WC:(h + 1) * WC, :] * ty_row(h)            # (W*Cp, TN)

    # Fold W with W multiply-accumulates over 8-aligned (Cp, TN) slices.
    def tx_row(w):
        return jnp.maximum(0.0, 1.0 - jnp.abs(gx - float(w)))           # (1, TN)

    accx = accy[0:Cp, :] * tx_row(0)
    for w in range(1, W):
        accx = accx + accy[w * Cp:(w + 1) * Cp, :] * tx_row(w)          # (Cp, TN)

    out_ref[...] = accx


def volume_forward(grid, x, fit_box=(1.0, 1.0, 1.0), tile_n=1024):
    """Pallas equivalent of Volume(grid, padding='zeros', aligned=True)(x)."""
    D, H, W, C = grid.shape
    scale = min(b / d for d, b in zip((D, H, W), fit_box))
    # bmin = -dim, bmax = +dim with dim reversed -> (x, y, z) extents = (W, H, D)*scale
    dim_x, dim_y, dim_z = W * scale, H * scale, D * scale

    # normalized n = coord / dim ; unnormalized g = (n + 1)/2 * (S - 1) = coord*a + b
    ax, bx = 0.5 * (W - 1) / dim_x, 0.5 * (W - 1)
    ay, by = 0.5 * (H - 1) / dim_y, 0.5 * (H - 1)
    az, bz = 0.5 * (D - 1) / dim_z, 0.5 * (D - 1)

    batch_shape = x.shape[:-1]
    pts = x.reshape(-1, 3).astype(jnp.float32)
    N = pts.shape[0]

    # Pad channels to a multiple of 8 so all in-kernel sublane slices are aligned.
    Cp = max(8, ((C + 7) // 8) * 8)

    # Point-tile sizing: lane multiples, 256 quantum for full MXU N tiles, capped by a
    # generation-aware VMEM budget for the (H*W*Cp, tn) intermediate, and split into
    # >= 2 grid steps when possible so v7x's second TensorCore is used.
    vmem_budget = _vmem_budget_bytes()
    lane, q = 128, 256
    tile_n = max(q, (tile_n // q) * q)
    slab_bytes_per_point = H * W * Cp * 4
    max_tn = max(lane, ((vmem_budget // 3) // slab_bytes_per_point) // lane * lane)
    if N <= lane:
        tn = lane
    elif N <= q:
        tn = q
    else:
        half = -(-N // 2)
        tn = min(tile_n, ((half + q - 1) // q) * q)
    tn = max(lane, min(tn, max_tn))

    Np = ((N + tn - 1) // tn) * tn
    if Np != N:
        pts = jnp.pad(pts, ((0, Np - N), (0, 0)))
    pts_t = pts.T                                                    # (3, Np)

    # Re-lay-out the volume so D is the contraction axis of the first matmul and the
    # row order is (h, w, c) with channels zero-padded to Cp.
    grid_g = grid.astype(jnp.float32).transpose(1, 2, 3, 0)          # (H, W, C, D)
    if Cp != C:
        grid_g = jnp.pad(grid_g, ((0, 0), (0, 0), (0, Cp - C), (0, 0)))
    grid_g = grid_g.reshape(H * W * Cp, D)

    kernel = functools.partial(_volume_sample_kernel, D=D, H=H, W=W, Cp=Cp,
                               ax=ax, bx=bx, ay=ay, by=by, az=az, bz=bz)

    out_t = pl.pallas_call(
        kernel,
        out_shape=jax.ShapeDtypeStruct((Cp, Np), jnp.float32),
        grid=(Np // tn,),
        in_specs=[
            pl.BlockSpec((3, tn), lambda i: (0, i)),          # point tile (lane-dense)
            pl.BlockSpec((H * W * Cp, D), lambda i: (0, 0)),  # whole grid, resident
        ],
        out_specs=pl.BlockSpec((Cp, tn), lambda i: (0, i)),   # lane-dense output tile
        compiler_params=pltpu.CompilerParams(
            dimension_semantics=("parallel",),
            vmem_limit_bytes=vmem_budget),
    )(pts_t, grid_g)

    return out_t[:C, :N].T.reshape(*batch_shape, C)


def volume_forward_ref(grid, x, fit_box=(1.0, 1.0, 1.0)):
    """Pure-JAX reference of torch.grid_sample (trilinear, zeros, align_corners=True)."""
    D, H, W, C = grid.shape
    scale = min(b / d for d, b in zip((D, H, W), fit_box))
    dims = jnp.array([W * scale, H * scale, D * scale], jnp.float32)
    n = x / dims
    gx = (n[..., 0] + 1.0) * 0.5 * (W - 1)
    gy = (n[..., 1] + 1.0) * 0.5 * (H - 1)
    gz = (n[..., 2] + 1.0) * 0.5 * (D - 1)

    def corners(g):
        g0 = jnp.floor(g)
        w1 = g - g0
        return ((g0.astype(jnp.int32), 1.0 - w1), (g0.astype(jnp.int32) + 1, w1))

    out = jnp.zeros(x.shape[:-1] + (C,), jnp.float32)
    for (iz, wz) in corners(gz):
        for (iy, wy) in corners(gy):
            for (ix, wx) in corners(gx):
                inb = ((iz >= 0) & (iz < D) & (iy >= 0) & (iy < H)
                       & (ix >= 0) & (ix < W)).astype(jnp.float32)
                val = grid[jnp.clip(iz, 0, D - 1),
                           jnp.clip(iy, 0, H - 1),
                           jnp.clip(ix, 0, W - 1)]
                out = out + (wz * wy * wx * inb)[..., None] * val
    return out


if __name__ == "__main__":
    key = jax.random.PRNGKey(0)
    kg, kx = jax.random.split(key)

    D, H, W, C = 8, 8, 8, 4
    grid = jax.random.normal(kg, (D, H, W, C), dtype=jnp.float32)
    # Points span slightly beyond the [-1, 1]^3 box to exercise zeros padding;
    # 600 points -> two point tiles (exercises padding + a multi-step parallel grid).
    x = jax.random.uniform(kx, (2, 300, 3), dtype=jnp.float32,
                           minval=-1.3, maxval=1.3)

    out = volume_forward(grid, x)
    out = jax.block_until_ready(out)

    ref = volume_forward_ref(grid, x)
    assert out.shape == (2, 300, C), out.shape
    err = float(jnp.max(jnp.abs(out - ref)))
    assert err < 1e-4, err

    print("KERNEL_OK")
</pallas_src>

<mosaic_0001>
module attributes {stable_mosaic.version = 11 : i64} {
  func.func @_volume_sample_kernel(%arg0: i32, %arg1: memref<3x512xf32, #tpu.memory_space<vmem>>, %arg2: memref<512x8xf32, #tpu.memory_space<vmem>>, %arg3: memref<8x512xf32, #tpu.memory_space<vmem>>) attributes {dimension_semantics = [#tpu.dimension_semantics<parallel>], iteration_bounds = array<i64: 2>, scalar_prefetch = 0 : i64, scratch_operands = 0 : i64, tpu.core_type = #tpu.core_type<tc>, window_params = [{transform_indices = @transform_0, window_bounds = array<i64: 3, 512>}, {pipeline_mode = #tpu.pipeline_mode<synchronous>, transform_indices = @transform_1, window_bounds = array<i64: 512, 8>}, {transform_indices = @transform_2, window_bounds = array<i64: 8, 512>}]} {
    %c0 = arith.constant 0 : index
    %c0_0 = arith.constant 0 : index
    %0 = vector.load %arg1[%c0, %c0_0] : memref<3x512xf32, #tpu.memory_space<vmem>>, vector<1x512xf32>
    %cst = arith.constant 3.500000e+00 : f32
    %1 = vector.broadcast %cst : f32 to vector<1x512xf32>
    %2 = arith.mulf %0, %1 : vector<1x512xf32>
    %cst_1 = arith.constant 3.500000e+00 : f32
    %3 = vector.broadcast %cst_1 : f32 to vector<1x512xf32>
    %4 = arith.addf %2, %3 : vector<1x512xf32>
    %c1 = arith.constant 1 : index
    %c0_2 = arith.constant 0 : index
    %5 = vector.load %arg1[%c1, %c0_2] : memref<3x512xf32, #tpu.memory_space<vmem>>, vector<1x512xf32>
    %cst_3 = arith.constant 3.500000e+00 : f32
    %6 = vector.broadcast %cst_3 : f32 to vector<1x512xf32>
    %7 = arith.mulf %5, %6 : vector<1x512xf32>
    %cst_4 = arith.constant 3.500000e+00 : f32
    %8 = vector.broadcast %cst_4 : f32 to vector<1x512xf32>
    %9 = arith.addf %7, %8 : vector<1x512xf32>
    %c2 = arith.constant 2 : index
    %c0_5 = arith.constant 0 : index
    %10 = vector.load %arg1[%c2, %c0_5] : memref<3x512xf32, #tpu.memory_space<vmem>>, vector<1x512xf32>
    %cst_6 = arith.constant 3.500000e+00 : f32
    %11 = vector.broadcast %cst_6 : f32 to vector<1x512xf32>
    %12 = arith.mulf %10, %11 : vector<1x512xf32>
    %cst_7 = arith.constant 3.500000e+00 : f32
    %13 = vector.broadcast %cst_7 : f32 to vector<1x512xf32>
    %14 = arith.addf %12, %13 : vector<1x512xf32>
    %15 = tpu.iota {dimensions = array<i32: 0>} : vector<8x512xi32>
    %16 = arith.sitofp %15 : vector<8x512xi32> to vector<8x512xf32>
    %17 = vector.broadcast %14 : vector<1x512xf32> to vector<8x512xf32>
    %18 = arith.subf %17, %16 : vector<8x512xf32>
    %19 = math.absf %18 : vector<8x512xf32>
    %cst_8 = arith.constant 1.000000e+00 : f32
    %20 = vector.broadcast %cst_8 : f32 to vector<8x512xf32>
    %21 = arith.subf %20, %19 : vector<8x512xf32>
    %cst_9 = arith.constant 0.000000e+00 : f32
    %22 = vector.broadcast %cst_9 : f32 to vector<8x512xf32>
    %23 = arith.maximumf %22, %21 : vector<8x512xf32>
    %c0_10 = arith.constant 0 : index
    %c0_11 = arith.constant 0 : index
    %24 = vector.load %arg2[%c0_10, %c0_11] : memref<512x8xf32, #tpu.memory_space<vmem>>, vector<512x8xf32>
    %cst_12 = arith.constant dense<0.000000e+00> : vector<512x512xf32>
    %25 = tpu.matmul %24, %23, %cst_12 {dimension_numbers = #tpu.dot_dimension_numbers<[1], [0], [0], [1], [0, 0, 1, 1], [], []>} : vector<512x8xf32>, vector<8x512xf32>, vector<512x512xf32> -> vector<512x512xf32>
    %26 = vector.extract_strided_slice %25 {offsets = [0, 0], sizes = [64, 512], strides = [1, 1]} : vector<512x512xf32> to vector<64x512xf32>
    %cst_13 = arith.constant 0.000000e+00 : f32
    %27 = vector.broadcast %cst_13 : f32 to vector<1x512xf32>
    %28 = arith.subf %9, %27 : vector<1x512xf32>
    %29 = math.absf %28 : vector<1x512xf32>
    %cst_14 = arith.constant 1.000000e+00 : f32
    %30 = vector.broadcast %cst_14 : f32 to vector<1x512xf32>
    %31 = arith.subf %30, %29 : vector<1x512xf32>
    %cst_15 = arith.constant 0.000000e+00 : f32
    %32 = vector.broadcast %cst_15 : f32 to vector<1x512xf32>
    %33 = arith.maximumf %32, %31 : vector<1x512xf32>
    %34 = vector.broadcast %33 : vector<1x512xf32> to vector<64x512xf32>
    %35 = arith.mulf %26, %34 : vector<64x512xf32>
    %36 = vector.extract_strided_slice %25 {offsets = [64, 0], sizes = [64, 512], strides = [1, 1]} : vector<512x512xf32> to vector<64x512xf32>
    %cst_16 = arith.constant 1.000000e+00 : f32
    %37 = vector.broadcast %cst_16 : f32 to vector<1x512xf32>
    %38 = arith.subf %9, %37 : vector<1x512xf32>
    %39 = math.absf %38 : vector<1x512xf32>
    %cst_17 = arith.constant 1.000000e+00 : f32
    %40 = vector.broadcast %cst_17 : f32 to vector<1x512xf32>
    %41 = arith.subf %40, %39 : vector<1x512xf32>
    %cst_18 = arith.constant 0.000000e+00 : f32
    %42 = vector.broadcast %cst_18 : f32 to vector<1x512xf32>
    %43 = arith.maximumf %42, %41 : vector<1x512xf32>
    %44 = vector.broadcast %43 : vector<1x512xf32> to vector<64x512xf32>
    %45 = arith.mulf %36, %44 : vector<64x512xf32>
    %46 = arith.addf %35, %45 : vector<64x512xf32>
    %47 = vector.extract_strided_slice %25 {offsets = [128, 0], sizes = [64, 512], strides = [1, 1]} : vector<512x512xf32> to vector<64x512xf32>
    %cst_19 = arith.constant 2.000000e+00 : f32
    %48 = vector.broadcast %cst_19 : f32 to vector<1x512xf32>
    %49 = arith.subf %9, %48 : vector<1x512xf32>
    %50 = math.absf %49 : vector<1x512xf32>
    %cst_20 = arith.constant 1.000000e+00 : f32
    %51 = vector.broadcast %cst_20 : f32 to vector<1x512xf32>
    %52 = arith.subf %51, %50 : vector<1x512xf32>
    %cst_21 = arith.constant 0.000000e+00 : f32
    %53 = vector.broadcast %cst_21 : f32 to vector<1x512xf32>
    %54 = arith.maximumf %53, %52 : vector<1x512xf32>
    %55 = vector.broadcast %54 : vector<1x512xf32> to vector<64x512xf32>
    %56 = arith.mulf %47, %55 : vector<64x512xf32>
    %57 = arith.addf %46, %56 : vector<64x512xf32>
    %58 = vector.extract_strided_slice %25 {offsets = [192, 0], sizes = [64, 512], strides = [1, 1]} : vector<512x512xf32> to vector<64x512xf32>
    %cst_22 = arith.constant 3.000000e+00 : f32
    %59 = vector.broadcast %cst_22 : f32 to vector<1x512xf32>
    %60 = arith.subf %9, %59 : vector<1x512xf32>
    %61 = math.absf %60 : vector<1x512xf32>
    %cst_23 = arith.constant 1.000000e+00 : f32
    %62 = vector.broadcast %cst_23 : f32 to vector<1x512xf32>
    %63 = arith.subf %62, %61 : vector<1x512xf32>
    %cst_24 = arith.constant 0.000000e+00 : f32
    %64 = vector.broadcast %cst_24 : f32 to vector<1x512xf32>
    %65 = arith.maximumf %64, %63 : vector<1x512xf32>
    %66 = vector.broadcast %65 : vector<1x512xf32> to vector<64x512xf32>
    %67 = arith.mulf %58, %66 : vector<64x512xf32>
    %68 = arith.addf %57, %67 : vector<64x512xf32>
    %69 = vector.extract_strided_slice %25 {offsets = [256, 0], sizes = [64, 512], strides = [1, 1]} : vector<512x512xf32> to vector<64x512xf32>
    %cst_25 = arith.constant 4.000000e+00 : f32
    %70 = vector.broadcast %cst_25 : f32 to vector<1x512xf32>
    %71 = arith.subf %9, %70 : vector<1x512xf32>
    %72 = math.absf %71 : vector<1x512xf32>
    %cst_26 = arith.constant 1.000000e+00 : f32
    %73 = vector.broadcast %cst_26 : f32 to vector<1x512xf32>
    %74 = arith.subf %73, %72 : vector<1x512xf32>
    %cst_27 = arith.constant 0.000000e+00 : f32
    %75 = vector.broadcast %cst_27 : f32 to vector<1x512xf32>
    %76 = arith.maximumf %75, %74 : vector<1x512xf32>
    %77 = vector.broadcast %76 : vector<1x512xf32> to vector<64x512xf32>
    %78 = arith.mulf %69, %77 : vector<64x512xf32>
    %79 = arith.addf %68, %78 : vector<64x512xf32>
    %80 = vector.extract_strided_slice %25 {offsets = [320, 0], sizes = [64, 512], strides = [1, 1]} : vector<512x512xf32> to vector<64x512xf32>
    %cst_28 = arith.constant 5.000000e+00 : f32
    %81 = vector.broadcast %cst_28 : f32 to vector<1x512xf32>
    %82 = arith.subf %9, %81 : vector<1x512xf32>
    %83 = math.absf %82 : vector<1x512xf32>
    %cst_29 = arith.constant 1.000000e+00 : f32
    %84 = vector.broadcast %cst_29 : f32 to vector<1x512xf32>
    %85 = arith.subf %84, %83 : vector<1x512xf32>
    %cst_30 = arith.constant 0.000000e+00 : f32
    %86 = vector.broadcast %cst_30 : f32 to vector<1x512xf32>
    %87 = arith.maximumf %86, %85 : vector<1x512xf32>
    %88 = vector.broadcast %87 : vector<1x512xf32> to vector<64x512xf32>
    %89 = arith.mulf %80, %88 : vector<64x512xf32>
    %90 = arith.addf %79, %89 : vector<64x512xf32>
    %91 = vector.extract_strided_slice %25 {offsets = [384, 0], sizes = [64, 512], strides = [1, 1]} : vector<512x512xf32> to vector<64x512xf32>
    %cst_31 = arith.constant 6.000000e+00 : f32
    %92 = vector.broadcast %cst_31 : f32 to vector<1x512xf32>
    %93 = arith.subf %9, %92 : vector<1x512xf32>
    %94 = math.absf %93 : vector<1x512xf32>
    %cst_32 = arith.constant 1.000000e+00 : f32
    %95 = vector.broadcast %cst_32 : f32 to vector<1x512xf32>
    %96 = arith.subf %95, %94 : vector<1x512xf32>
    %cst_33 = arith.constant 0.000000e+00 : f32
    %97 = vector.broadcast %cst_33 : f32 to vector<1x512xf32>
    %98 = arith.maximumf %97, %96 : vector<1x512xf32>
    %99 = vector.broadcast %98 : vector<1x512xf32> to vector<64x512xf32>
    %100 = arith.mulf %91, %99 : vector<64x512xf32>
    %101 = arith.addf %90, %100 : vector<64x512xf32>
    %102 = vector.extract_strided_slice %25 {offsets = [448, 0], sizes = [64, 512], strides = [1, 1]} : vector<512x512xf32> to vector<64x512xf32>
    %cst_34 = arith.constant 7.000000e+00 : f32
    %103 = vector.broadcast %cst_34 : f32 to vector<1x512xf32>
    %104 = arith.subf %9, %103 : vector<1x512xf32>
    %105 = math.absf %104 : vector<1x512xf32>
    %cst_35 = arith.constant 1.000000e+00 : f32
    %106 = vector.broadcast %cst_35 : f32 to vector<1x512xf32>
    %107 = arith.subf %106, %105 : vector<1x512xf32>
    %cst_36 = arith.constant 0.000000e+00 : f32
    %108 = vector.broadcast %cst_36 : f32 to vector<1x512xf32>
    %109 = arith.maximumf %108, %107 : vector<1x512xf32>
    %110 = vector.broadcast %109 : vector<1x512xf32> to vector<64x512xf32>
    %111 = arith.mulf %102, %110 : vector<64x512xf32>
    %112 = arith.addf %101, %111 : vector<64x512xf32>
    %113 = vector.extract_strided_slice %112 {offsets = [0, 0], sizes = [8, 512], strides = [1, 1]} : vector<64x512xf32> to vector<8x512xf32>
    %cst_37 = arith.constant 0.000000e+00 : f32
    %114 = vector.broadcast %cst_37 : f32 to vector<1x512xf32>
    %115 = arith.subf %4, %114 : vector<1x512xf32>
    %116 = math.absf %115 : vector<1x512xf32>
    %cst_38 = arith.constant 1.000000e+00 : f32
    %117 = vector.broadcast %cst_38 : f32 to vector<1x512xf32>
    %118 = arith.subf %117, %116 : vector<1x512xf32>
    %cst_39 = arith.constant 0.000000e+00 : f32
    %119 = vector.broadcast %cst_39 : f32 to vector<1x512xf32>
    %120 = arith.maximumf %119, %118 : vector<1x512xf32>
    %121 = vector.broadcast %120 : vector<1x512xf32> to vector<8x512xf32>
    %122 = arith.mulf %113, %121 : vector<8x512xf32>
    %123 = vector.extract_strided_slice %112 {offsets = [8, 0], sizes = [8, 512], strides = [1, 1]} : vector<64x512xf32> to vector<8x512xf32>
    %cst_40 = arith.constant 1.000000e+00 : f32
    %124 = vector.broadcast %cst_40 : f32 to vector<1x512xf32>
    %125 = arith.subf %4, %124 : vector<1x512xf32>
    %126 = math.absf %125 : vector<1x512xf32>
    %cst_41 = arith.constant 1.000000e+00 : f32
    %127 = vector.broadcast %cst_41 : f32 to vector<1x512xf32>
    %128 = arith.subf %127, %126 : vector<1x512xf32>
    %cst_42 = arith.constant 0.000000e+00 : f32
    %129 = vector.broadcast %cst_42 : f32 to vector<1x512xf32>
    %130 = arith.maximumf %129, %128 : vector<1x512xf32>
    %131 = vector.broadcast %130 : vector<1x512xf32> to vector<8x512xf32>
    %132 = arith.mulf %123, %131 : vector<8x512xf32>
    %133 = arith.addf %122, %132 : vector<8x512xf32>
    %134 = vector.extract_strided_slice %112 {offsets = [16, 0], sizes = [8, 512], strides = [1, 1]} : vector<64x512xf32> to vector<8x512xf32>
    %cst_43 = arith.constant 2.000000e+00 : f32
    %135 = vector.broadcast %cst_43 : f32 to vector<1x512xf32>
    %136 = arith.subf %4, %135 : vector<1x512xf32>
    %137 = math.absf %136 : vector<1x512xf32>
    %cst_44 = arith.constant 1.000000e+00 : f32
    %138 = vector.broadcast %cst_44 : f32 to vector<1x512xf32>
    %139 = arith.subf %138, %137 : vector<1x512xf32>
    %cst_45 = arith.constant 0.000000e+00 : f32
    %140 = vector.broadcast %cst_45 : f32 to vector<1x512xf32>
    %141 = arith.maximumf %140, %139 : vector<1x512xf32>
    %142 = vector.broadcast %141 : vector<1x512xf32> to vector<8x512xf32>
    %143 = arith.mulf %134, %142 : vector<8x512xf32>
    %144 = arith.addf %133, %143 : vector<8x512xf32>
    %145 = vector.extract_strided_slice %112 {offsets = [24, 0], sizes = [8, 512], strides = [1, 1]} : vector<64x512xf32> to vector<8x512xf32>
    %cst_46 = arith.constant 3.000000e+00 : f32
    %146 = vector.broadcast %cst_46 : f32 to vector<1x512xf32>
    %147 = arith.subf %4, %146 : vector<1x512xf32>
    %148 = math.absf %147 : vector<1x512xf32>
    %cst_47 = arith.constant 1.000000e+00 : f32
    %149 = vector.broadcast %cst_47 : f32 to vector<1x512xf32>
    %150 = arith.subf %149, %148 : vector<1x512xf32>
    %cst_48 = arith.constant 0.000000e+00 : f32
    %151 = vector.broadcast %cst_48 : f32 to vector<1x512xf32>
    %152 = arith.maximumf %151, %150 : vector<1x512xf32>
    %153 = vector.broadcast %152 : vector<1x512xf32> to vector<8x512xf32>
    %154 = arith.mulf %145, %153 : vector<8x512xf32>
    %155 = arith.addf %144, %154 : vector<8x512xf32>
    %156 = vector.extract_strided_slice %112 {offsets = [32, 0], sizes = [8, 512], strides = [1, 1]} : vector<64x512xf32> to vector<8x512xf32>
    %cst_49 = arith.constant 4.000000e+00 : f32
    %157 = vector.broadcast %cst_49 : f32 to vector<1x512xf32>
    %158 = arith.subf %4, %157 : vector<1x512xf32>
    %159 = math.absf %158 : vector<1x512xf32>
    %cst_50 = arith.constant 1.000000e+00 : f32
    %160 = vector.broadcast %cst_50 : f32 to vector<1x512xf32>
    %161 = arith.subf %160, %159 : vector<1x512xf32>
    %cst_51 = arith.constant 0.000000e+00 : f32
    %162 = vector.broadcast %cst_51 : f32 to vector<1x512xf32>
    %163 = arith.maximumf %162, %161 : vector<1x512xf32>
    %164 = vector.broadcast %163 : vector<1x512xf32> to vector<8x512xf32>
    %165 = arith.mulf %156, %164 : vector<8x512xf32>
    %166 = arith.addf %155, %165 : vector<8x512xf32>
    %167 = vector.extract_strided_slice %112 {offsets = [40, 0], sizes = [8, 512], strides = [1, 1]} : vector<64x512xf32> to vector<8x512xf32>
    %cst_52 = arith.constant 5.000000e+00 : f32
    %168 = vector.broadcast %cst_52 : f32 to vector<1x512xf32>
    %169 = arith.subf %4, %168 : vector<1x512xf32>
    %170 = math.absf %169 : vector<1x512xf32>
    %cst_53 = arith.constant 1.000000e+00 : f32
    %171 = vector.broadcast %cst_53 : f32 to vector<1x512xf32>
    %172 = arith.subf %171, %170 : vector<1x512xf32>
    %cst_54 = arith.constant 0.000000e+00 : f32
    %173 = vector.broadcast %cst_54 : f32 to vector<1x512xf32>
    %174 = arith.maximumf %173, %172 : vector<1x512xf32>
    %175 = vector.broadcast %174 : vector<1x512xf32> to vector<8x512xf32>
    %176 = arith.mulf %167, %175 : vector<8x512xf32>
    %177 = arith.addf %166, %176 : vector<8x512xf32>
    %178 = vector.extract_strided_slice %112 {offsets = [48, 0], sizes = [8, 512], strides = [1, 1]} : vector<64x512xf32> to vector<8x512xf32>
    %cst_55 = arith.constant 6.000000e+00 : f32
    %179 = vector.broadcast %cst_55 : f32 to vector<1x512xf32>
    %180 = arith.subf %4, %179 : vector<1x512xf32>
    %181 = math.absf %180 : vector<1x512xf32>
    %cst_56 = arith.constant 1.000000e+00 : f32
    %182 = vector.broadcast %cst_56 : f32 to vector<1x512xf32>
    %183 = arith.subf %182, %181 : vector<1x512xf32>
    %cst_57 = arith.constant 0.000000e+00 : f32
    %184 = vector.broadcast %cst_57 : f32 to vector<1x512xf32>
    %185 = arith.maximumf %184, %183 : vector<1x512xf32>
    %186 = vector.broadcast %185 : vector<1x512xf32> to vector<8x512xf32>
    %187 = arith.mulf %178, %186 : vector<8x512xf32>
    %188 = arith.addf %177, %187 : vector<8x512xf32>
    %189 = vector.extract_strided_slice %112 {offsets = [56, 0], sizes = [8, 512], strides = [1, 1]} : vector<64x512xf32> to vector<8x512xf32>
    %cst_58 = arith.constant 7.000000e+00 : f32
    %190 = vector.broadcast %cst_58 : f32 to vector<1x512xf32>
    %191 = arith.subf %4, %190 : vector<1x512xf32>
    %192 = math.absf %191 : vector<1x512xf32>
    %cst_59 = arith.constant 1.000000e+00 : f32
    %193 = vector.broadcast %cst_59 : f32 to vector<1x512xf32>
    %194 = arith.subf %193, %192 : vector<1x512xf32>
    %cst_60 = arith.constant 0.000000e+00 : f32
    %195 = vector.broadcast %cst_60 : f32 to vector<1x512xf32>
    %196 = arith.maximumf %195, %194 : vector<1x512xf32>
    %197 = vector.broadcast %196 : vector<1x512xf32> to vector<8x512xf32>
    %198 = arith.mulf %189, %197 : vector<8x512xf32>
    %199 = arith.addf %188, %198 : vector<8x512xf32>
    %c0_61 = arith.constant 0 : index
    %c0_62 = arith.constant 0 : index
    %200 = vector.load %arg3[%c0_61, %c0_62] : memref<8x512xf32, #tpu.memory_space<vmem>>, vector<8x512xf32>
    tpu.vector_store %arg3[%c0_61, %c0_62], %199 {strides = array<i32>} : memref<8x512xf32, #tpu.memory_space<vmem>>, vector<8x512xf32>,
    return
  }
  func.func @transform_0(%arg0: i32) -> (i32, i32) {
    %c0_i32 = arith.constant 0 : i32
    %c0_i32_0 = arith.constant 0 : i32
    return %c0_i32, %arg0 : i32, i32
  }
  func.func @transform_1(%arg0: i32) -> (i32, i32) {
    %c0_i32 = arith.constant 0 : i32
    %c0_i32_0 = arith.constant 0 : i32
    %c0_i32_1 = arith.constant 0 : i32
    return %c0_i32, %c0_i32_0 : i32, i32
  }
  func.func @transform_2(%arg0: i32) -> (i32, i32) {
    %c0_i32 = arith.constant 0 : i32
    %c0_i32_0 = arith.constant 0 : i32
    return %c0_i32, %arg0 : i32, i32
  }
}

</mosaic_0001>

<llo_original>
// kernel: tpu_custom_call.1
$region0: #{tpu_custom_call.1}
  #allocation0 [shape = 'u32[]', space=smem, size = 0x4, offset = 0x4, fixed_abs, tag = 'smem constant byte address 0x4 - core index']
  #allocation1 [shape = 'u32[144,128]{1,0:T(1,128)}', space=vmem, size = 0x12000, scoped, tag = 'internal scratch']
  %s0 = inlined_call_operand.vmem [shape: f32[3,1024], index: 0, kind: input, shape index: {}]
  %s1 = inlined_call_operand.vmem [shape: f32[512,8], index: 1, kind: input, shape index: {}]
  %s2 = inlined_call_operand.hbm [shape: f32[8,1024], index: 2, kind: output, shape index: {}]
  %s3 = sld [smem:[#allocation0]]
  $region41: #{tpu_custom_call.1} parent=0
    _
  %s5 = ssub.s32 1, %s3
  %s6 = scalar_select 0, %s5, %s3
  $region1: #{tpu_custom_call.1} parent=0
    #allocation2 [shape = 'u8[32768]{0}', space=vmem, size = 0x8000, scoped, tag = 'output window, operand 0']
    #allocation3 [shape = 's32[2]{0}', space=sflag, size = 0x8, scoped, tag = 'scoped memory for tpu_custom_call.1']
    %7 = vsyncpa [#allocation3], 0
    %s8 = scalar_lea.sflag [#allocation3], 1
    %9 = vsyncpa %s8, 0
    loop: start=0, step=1, limit=4
    $region2: #{tpu_custom_call.1} parent=1 // loop_pre_header
      _
    $region3: #{tpu_custom_call.1} parent=1 // loop_header
      %s11 = sphi 0, %s15
      %p12 = scmp.ge.s32.totalorder %s11, 4
      %s21 = sphi 0, %s23
      %s24 = sphi 0, %s21
      %s25 = sphi 0, %s24
      %s41 = sphi 0, %s25
      %s45 = sphi 0, %s45
      %s47 = sphi 0, %s45
      %s48 = sphi 0, %s47
      %s62 = sphi 0, %s48
      %s68 = sphi 0, %s70
      %s71 = sphi 0, %s68
      %s72 = sphi 0, %s71
      %s88 = sphi 0, %s72
    $region4: #{tpu_custom_call.1} parent=1 // loop_header_branch
      %14 = sbr.rel (%p12) target = $region8
    $region5: #{tpu_custom_call.1} parent=1 // loop_body
      %s16 = ssub.s32 %s11, 1
      %s17 = ssub.s32 %s11, 2
      %s18 = sadd.s32 %s11, 1
      %s19 = ssub.s32 %s11, %s18
      %p20 = scmp.eq.s32.totalorder %s19, 0
      %s22 = sadd.s32 %s21, 1
      %s23 = scalar_select %p20, %s21, %s22
      %p26 = pneg %p20
      %p27 = scmp.eq.s32.totalorder %s11, 1
      %p28 = por %p26, %p27
      %p29 = scmp.ne.s32.totalorder %s21, %s24
      %p30 = scmp.eq.s32.totalorder %s11, 0
      %p31 = por %p29, %p30
      %p32 = scmp.ne.s32.totalorder %s21, %s24
      %p33 = scmp.eq.s32.totalorder %s16, 1
      %p34 = por %p32, %p33
      %p35 = scmp.ne.s32.totalorder %s24, %s25
      %p36 = scmp.eq.s32.totalorder %s16, 0
      %p37 = por %p35, %p36
      %p38 = scmp.ne.s32.totalorder %s24, %s25
      %p39 = scmp.eq.s32.totalorder %s17, 1
      %p40 = por %p38, %p39
      %p42 = scmp.ne.s32.totalorder %s25, %s41
      %p43 = scmp.eq.s32.totalorder %s17, 0
      %p44 = por %p42, %p43
      %s46 = sadd.s32 %s45, 1
      %p49 = scmp.eq.s32.totalorder %s11, 1
      %p50 = scmp.ne.s32.totalorder %s45, %s47
      %p51 = scmp.eq.s32.totalorder %s11, 0
      %p52 = por %p50, %p51
      %p53 = scmp.ne.s32.totalorder %s45, %s47
      %p54 = scmp.eq.s32.totalorder %s16, 1
      %p55 = por %p53, %p54
      %p56 = scmp.ne.s32.totalorder %s47, %s48
      %p57 = scmp.eq.s32.totalorder %s16, 0
      %p58 = por %p56, %p57
      %p59 = scmp.ne.s32.totalorder %s47, %s48
      %p60 = scmp.eq.s32.totalorder %s17, 1
      %p61 = por %p59, %p60
      %p63 = scmp.ne.s32.totalorder %s48, %s62
      %p64 = scmp.eq.s32.totalorder %s17, 0
      %p65 = por %p63, %p64
      %s66 = ssub.s32 %s11, %s18
      %p67 = scmp.eq.s32.totalorder %s66, 0
      %s69 = sadd.s32 %s68, 1
      %s70 = scalar_select %p67, %s68, %s69
      %p73 = pneg %p67
      %p74 = scmp.eq.s32.totalorder %s11, 1
      %p75 = por %p73, %p74
      %p76 = scmp.ne.s32.totalorder %s68, %s71
      %p77 = scmp.eq.s32.totalorder %s11, 0
      %p78 = por %p76, %p77
      %p79 = scmp.ne.s32.totalorder %s68, %s71
      %p80 = scmp.eq.s32.totalorder %s16, 1
      %p81 = por %p79, %p80
      %p82 = scmp.ne.s32.totalorder %s71, %s72
      %p83 = scmp.eq.s32.totalorder %s16, 0
      %p84 = por %p82, %p83
      %p85 = scmp.ne.s32.totalorder %s71, %s72
      %p86 = scmp.eq.s32.totalorder %s17, 1
      %p87 = por %p85, %p86
      %p89 = scmp.ne.s32.totalorder %s72, %s88
      %p90 = scmp.eq.s32.totalorder %s17, 0
      %p91 = por %p89, %p90
      %p92 = scmp.le.s32.totalorder 1, %s11
      %p93 = scmp.lt.s32.totalorder %s11, 3
      %p94 = pnand %p92, %p93
      %p95 = pneg %p94
      // Predicated region
      $region9: #{tpu_custom_call.1} parent=5 // pred_check
        _
      $region10: #{tpu_custom_call.1} parent=5 // pred_check_branch
        %97 = sbr.rel (%p94) target = $region12
      $region11: #{tpu_custom_call.1} parent=5 // pred_region
        %s98 = ssub.s32 %s11, 1
        // Predicated region
        $region13: #{tpu_custom_call.1} parent=11 // pred_check
          %p99 = pneg %p58
        $region14: #{tpu_custom_call.1} parent=11 // pred_check_branch
          %101 = sbr.rel (%p99) target = $region16
        $region15: #{tpu_custom_call.1} parent=11 // pred_region
          _
        $region16: #{tpu_custom_call.1} parent=11 // pred_fallthru
          _
      $region12: #{tpu_custom_call.1} parent=5 // pred_fallthru
        _
      %p102 = scmp.lt.s32.totalorder %s11, 2
      // Predicated region
      $region17: #{tpu_custom_call.1} parent=5 // pred_check
        %p103 = pneg %p102
      $region18: #{tpu_custom_call.1} parent=5 // pred_check_branch
        %105 = sbr.rel (%p103) target = $region20
      $region19: #{tpu_custom_call.1} parent=5 // pred_region
        // Predicated region
        $region21: #{tpu_custom_call.1} parent=19 // pred_check
          %p106 = pneg %p31
        $region22: #{tpu_custom_call.1} parent=19 // pred_check_branch
          %108 = sbr.rel (%p106) target = $region24
        $region23: #{tpu_custom_call.1} parent=19 // pred_region
          %s109 = smul.u32 4, %s11
          %p110 = scmp.lt.s32.totalorder %s109, 7
          %s111 = scalar_select %p110, %s109, 7
          %s112 = smul.addr %s111, 4
          %s113 = scalar_lea.vmem %s0, %s112
          %s114 = smul.u32 4, %s11
        $region24: #{tpu_custom_call.1} parent=19 // pred_fallthru
          _
      $region20: #{tpu_custom_call.1} parent=5 // pred_fallthru
        _
      %p115 = scmp.le.s32.totalorder 1, %s11
      %p116 = scmp.lt.s32.totalorder %s11, 3
      %p117 = pnand %p115, %p116
      %p118 = pneg %p117
      // Predicated region
      $region25: #{tpu_custom_call.1} parent=5 // pred_check
        _
      $region26: #{tpu_custom_call.1} parent=5 // pred_check_branch
        %120 = sbr.rel (%p117) target = $region28
      $region27: #{tpu_custom_call.1} parent=5 // pred_region
        %s121 = ssub.s32 %s11, 1
        %s122 = smul.u32 4, %s16
        %p123 = scmp.lt.s32.totalorder %s122, 7
        %s124 = scalar_select %p123, %s122, 7
        %s125 = smul.addr %s124, 4
        %s126 = scalar_lea.vmem %s0, %s125
        %p127 = pneg %p37
        %p128 = pneg %p34
        %p129 = pneg %p58
        %p130 = pneg %p55
        %p131 = pneg %p84
        %p132 = pneg %p81
        %s133 = sand.u32 %s71, 1
        %s134 = scalar_lea.sflag [#allocation3], %s133
        %s135 = sand.u32 %s71, 1
        %s136 = smul.addr %s135, 32
        %s137 = scalar_lea.vmem [#allocation2], %s136
        %s138 = smul.u32 4, %s16
        %p139 = scmp.lt.s32.totalorder %s138, 7
        %s140 = scalar_select %p139, %s138, 7
        %s141 = smul.addr %s140, 4
        %s142 = scalar_lea.vmem %s0, %s141
        %s143 = smul.u32 4, %s16
        %s144 = smul.u32 4, %s16
        %v145 = vld [vmem:[%s142] ss:$4 sm:$0xf]
        %v146 = vmul.f32 %v145, 3.5
        %v147 = vadd.f32 %v146, 3.5
        %s148 = scalar_lea.vmem %s142, 1
        %v149 = vld [vmem:[%s148] ss:$4 sm:$0xf]
        %v150 = vmul.f32 %v149, 3.5
        %v151 = vadd.f32 %v150, 3.5
        %s152 = scalar_lea.vmem %s142, 2
        %v153 = vld [vmem:[%s152] ss:$4 sm:$0xf]
        %v154 = vmul.f32 %v153, 3.5
        %v155 = vadd.f32 %v154, 3.5
        %v156 = vlaneseq
        %v157 = vshrl.u32 %v156, 7
        %v158 = vcvt.s32.f32 %v157
        %v160 = vlaneseq
        %v161 = vshrl.u32 %v160, 7
        %v162 = vsub.s32 0, %v161
        %v163 = vrot.slane %v155, %v162
        %v164 = vlaneseq
        %v165 = vshrl.u32 %v164, 7
        %v166 = vsub.s32 1, %v165
        %v167 = vrot.slane %v155, %v166
        %v168 = vlaneseq
        %v169 = vshrl.u32 %v168, 7
        %v170 = vsub.s32 2, %v169
        %v171 = vrot.slane %v155, %v170
        %v172 = vlaneseq
        %v173 = vshrl.u32 %v172, 7
        %v174 = vsub.s32 3, %v173
        %v175 = vrot.slane %v155, %v174
        %v180 = vsub.f32 %v163, %v158
        %v181 = vsub.f32 %v167, %v158
        %v182 = vsub.f32 %v171, %v158
        %v183 = vsub.f32 %v175, %v158
        %v184 = vand.u32 2147483647, %v180
        %v185 = vand.u32 2147483647, %v181
        %v186 = vand.u32 2147483647, %v182
        %v187 = vand.u32 2147483647, %v183
        %v188 = vsub.f32 1.0, %v184
        %v189 = vsub.f32 1.0, %v185
        %v190 = vsub.f32 1.0, %v186
        %v191 = vsub.f32 1.0, %v187
        %v192 = vmax.f32 %v188, 0.0
        %v193 = vmax.f32 %v189, 0.0
        %v194 = vmax.f32 %v190, 0.0
        %v195 = vmax.f32 %v191, 0.0
        %v196 = vld [vmem:[%s1] sm:$0xff]
        %v197 = vld [vmem:[%s1 + $0x8] sm:$0xff]
        %v198 = vld [vmem:[%s1 + $0x10] sm:$0xff]
        %v199 = vld [vmem:[%s1 + $0x18] sm:$0xff]
        %v200 = vld [vmem:[%s1 + $0x20] sm:$0xff]
        %v201 = vld [vmem:[%s1 + $0x28] sm:$0xff]
        %v202 = vld [vmem:[%s1 + $0x30] sm:$0xff]
        %v203 = vld [vmem:[%s1 + $0x38] sm:$0xff]
        %v204 = vld [vmem:[%s1 + $0x40] sm:$0xff]
        %v205 = vld [vmem:[%s1 + $0x48] sm:$0xff]
        %v206 = vld [vmem:[%s1 + $0x50] sm:$0xff]
        %v207 = vld [vmem:[%s1 + $0x58] sm:$0xff]
        %v208 = vld [vmem:[%s1 + $0x60] sm:$0xff]
        %v209 = vld [vmem:[%s1 + $0x68] sm:$0xff]
        %v210 = vld [vmem:[%s1 + $0x70] sm:$0xff]
        %v211 = vld [vmem:[%s1 + $0x78] sm:$0xff]
        %v212 = vld [vmem:[%s1 + $0x80] sm:$0xff]
        %v213 = vld [vmem:[%s1 + $0x88] sm:$0xff]
        %v214 = vld [vmem:[%s1 + $0x90] sm:$0xff]
        %v215 = vld [vmem:[%s1 + $0x98] sm:$0xff]
        %v216 = vld [vmem:[%s1 + $0xa0] sm:$0xff]
        %v217 = vld [vmem:[%s1 + $0xa8] sm:$0xff]
        %v218 = vld [vmem:[%s1 + $0xb0] sm:$0xff]
        %v219 = vld [vmem:[%s1 + $0xb8] sm:$0xff]
        %v220 = vld [vmem:[%s1 + $0xc0] sm:$0xff]
        %v221 = vld [vmem:[%s1 + $0xc8] sm:$0xff]
        %v222 = vld [vmem:[%s1 + $0xd0] sm:$0xff]
        %v223 = vld [vmem:[%s1 + $0xd8] sm:$0xff]
        %v224 = vld [vmem:[%s1 + $0xe0] sm:$0xff]
        %v225 = vld [vmem:[%s1 + $0xe8] sm:$0xff]
        %v226 = vld [vmem:[%s1 + $0xf0] sm:$0xff]
        %v227 = vld [vmem:[%s1 + $0xf8] sm:$0xff]
        %v228 = vld [vmem:[%s1 + $0x100] sm:$0xff]
        %v229 = vld [vmem:[%s1 + $0x108] sm:$0xff]
        %v230 = vld [vmem:[%s1 + $0x110] sm:$0xff]
        %v231 = vld [vmem:[%s1 + $0x118] sm:$0xff]
        %v232 = vld [vmem:[%s1 + $0x120] sm:$0xff]
        %v233 = vld [vmem:[%s1 + $0x128] sm:$0xff]
        %v234 = vld [vmem:[%s1 + $0x130] sm:$0xff]
        %v235 = vld [vmem:[%s1 + $0x138] sm:$0xff]
        %v236 = vld [vmem:[%s1 + $0x140] sm:$0xff]
        %v237 = vld [vmem:[%s1 + $0x148] sm:$0xff]
        %v238 = vld [vmem:[%s1 + $0x150] sm:$0xff]
        %v239 = vld [vmem:[%s1 + $0x158] sm:$0xff]
        %v240 = vld [vmem:[%s1 + $0x160] sm:$0xff]
        %v241 = vld [vmem:[%s1 + $0x168] sm:$0xff]
        %v242 = vld [vmem:[%s1 + $0x170] sm:$0xff]
        %v243 = vld [vmem:[%s1 + $0x178] sm:$0xff]
        %v244 = vld [vmem:[%s1 + $0x180] sm:$0xff]
        %v245 = vld [vmem:[%s1 + $0x188] sm:$0xff]
        %v246 = vld [vmem:[%s1 + $0x190] sm:$0xff]
        %v247 = vld [vmem:[%s1 + $0x198] sm:$0xff]
        %v248 = vld [vmem:[%s1 + $0x1a0] sm:$0xff]
        %v249 = vld [vmem:[%s1 + $0x1a8] sm:$0xff]
        %v250 = vld [vmem:[%s1 + $0x1b0] sm:$0xff]
        %v251 = vld [vmem:[%s1 + $0x1b8] sm:$0xff]
        %v252 = vld [vmem:[%s1 + $0x1c0] sm:$0xff]
        %v253 = vld [vmem:[%s1 + $0x1c8] sm:$0xff]
        %v254 = vld [vmem:[%s1 + $0x1d0] sm:$0xff]
        %v255 = vld [vmem:[%s1 + $0x1d8] sm:$0xff]
        %v256 = vld [vmem:[%s1 + $0x1e0] sm:$0xff]
        %v257 = vld [vmem:[%s1 + $0x1e8] sm:$0xff]
        %v258 = vld [vmem:[%s1 + $0x1f0] sm:$0xff]
        %v259 = vld [vmem:[%s1 + $0x1f8] sm:$0xff]
        %vm260 = vcmask 64512
        %v262 = vsel %vm260, %v196, 0
        %v265 = vsel %vm260, %v197, 0
        %v268 = vsel %vm260, %v198, 0
        %v271 = vsel %vm260, %v199, 0
        %v274 = vsel %vm260, %v200, 0
        %v277 = vsel %vm260, %v201, 0
        %v280 = vsel %vm260, %v202, 0
        %v283 = vsel %vm260, %v203, 0
        %v286 = vsel %vm260, %v204, 0
        %v289 = vsel %vm260, %v205, 0
        %v292 = vsel %vm260, %v206, 0
        %v295 = vsel %vm260, %v207, 0
        %v298 = vsel %vm260, %v208, 0
        %v301 = vsel %vm260, %v209, 0
        %v304 = vsel %vm260, %v210, 0
        %v307 = vsel %vm260, %v211, 0
        %v310 = vsel %vm260, %v212, 0
        %v313 = vsel %vm260, %v213, 0
        %v316 = vsel %vm260, %v214, 0
        %v319 = vsel %vm260, %v215, 0
        %v322 = vsel %vm260, %v216, 0
        %v325 = vsel %vm260, %v217, 0
        %v328 = vsel %vm260, %v218, 0
        %v331 = vsel %vm260, %v219, 0
        %v334 = vsel %vm260, %v220, 0
        %v337 = vsel %vm260, %v221, 0
        %v340 = vsel %vm260, %v222, 0
        %v343 = vsel %vm260, %v223, 0
        %v346 = vsel %vm260, %v224, 0
        %v349 = vsel %vm260, %v225, 0
        %v352 = vsel %vm260, %v226, 0
        %v355 = vsel %vm260, %v227, 0
        %v358 = vsel %vm260, %v228, 0
        %v361 = vsel %vm260, %v229, 0
        %v364 = vsel %vm260, %v230, 0
        %v367 = vsel %vm260, %v231, 0
        %v370 = vsel %vm260, %v232, 0
        %v373 = vsel %vm260, %v233, 0
        %v376 = vsel %vm260, %v234, 0
        %v379 = vsel %vm260, %v235, 0
        %v382 = vsel %vm260, %v236, 0
        %v385 = vsel %vm260, %v237, 0
        %v388 = vsel %vm260, %v238, 0
        %v391 = vsel %vm260, %v239, 0
        %v394 = vsel %vm260, %v240, 0
        %v397 = vsel %vm260, %v241, 0
        %v400 = vsel %vm260, %v242, 0
        %v403 = vsel %vm260, %v243, 0
        %v406 = vsel %vm260, %v244, 0
        %v409 = vsel %vm260, %v245, 0
        %v412 = vsel %vm260, %v246, 0
        %v415 = vsel %vm260, %v247, 0
        %v418 = vsel %vm260, %v248, 0
        %v421 = vsel %vm260, %v249, 0
        %v424 = vsel %vm260, %v250, 0
        %v427 = vsel %vm260, %v251, 0
        %v430 = vsel %vm260, %v252, 0
        %v433 = vsel %vm260, %v253, 0
        %v436 = vsel %vm260, %v254, 0
        %v439 = vsel %vm260, %v255, 0
        %v442 = vsel %vm260, %v256, 0
        %v445 = vsel %vm260, %v257, 0
        %v448 = vsel %vm260, %v258, 0
        %v451 = vsel %vm260, %v259, 0
        %453 = vmatprep.subr.mxu0 0.0
        %454 = vmatpush1.msra.mxu0 0.0
        %455 = vmatprep.subr.mxu0 0.0
        %456 = vmatpush1.msra.mxu0 0.0
        %457 = vmatprep.subr.mxu0 0.0
        %458 = vmatpush1.msra.mxu0 0.0
        %459 = vmatprep.subr.mxu0 0.0
        %460 = vmatpush1.msra.mxu0 0.0
        %461 = vmatprep.subr.mxu0 0.0
        %462 = vmatpush1.msra.mxu0 0.0
        %463 = vmatprep.subr.mxu0 0.0
        %464 = vmatpush1.msra.mxu0 0.0
        %465 = vmatprep.subr.mxu0 0.0
        %466 = vmatpush1.msra.mxu0 0.0
        %467 = vmatprep.subr.mxu0 0.0
        %468 = vmatpush1.msra.mxu0 0.0
        %469 = vmatprep.subr.mxu0 0.0
        %470 = vmatpush1.msra.mxu0 0.0
        %471 = vmatprep.subr.mxu0 0.0
        %472 = vmatpush1.msra.mxu0 0.0
        %473 = vmatprep.subr.mxu0 0.0
        %474 = vmatpush1.msra.mxu0 0.0
        %475 = vmatprep.subr.mxu0 0.0
        %476 = vmatpush1.msra.mxu0 0.0
        %477 = vmatprep.subr.mxu0 0.0
        %478 = vmatpush1.msra.mxu0 0.0
        %479 = vmatprep.subr.mxu0 0.0
        %480 = vmatpush1.msra.mxu0 0.0
        %481 = vmatprep.subr.mxu0 0.0
        %482 = vmatpush1.msra.mxu0 0.0
        %483 = vmatprep.subr.mxu0 %v193
        %484 = vmatpush1.msra.mxu0 %v192
        %485 = vmatprep.subr.mxu0 0.0
        %486 = vmatpush2.msra.mxu0 0.0
        %487 = vmatprep.subr.mxu0 0.0
        %488 = vmatpush2.msra.mxu0 0.0
        %489 = vmatprep.subr.mxu0 0.0
        %490 = vmatpush2.msra.mxu0 0.0
        %491 = vmatprep.subr.mxu0 0.0
        %492 = vmatpush2.msra.mxu0 0.0
        %493 = vmatprep.subr.mxu0 0.0
        %494 = vmatpush2.msra.mxu0 0.0
        %495 = vmatprep.subr.mxu0 0.0
        %496 = vmatpush2.msra.mxu0 0.0
        %497 = vmatprep.subr.mxu0 0.0
        %498 = vmatpush2.msra.mxu0 0.0
        %499 = vmatprep.subr.mxu0 0.0
        %500 = vmatpush2.msra.mxu0 0.0
        %501 = vmatprep.subr.mxu0 0.0
        %502 = vmatpush2.msra.mxu0 0.0
        %503 = vmatprep.subr.mxu0 0.0
        %504 = vmatpush2.msra.mxu0 0.0
        %505 = vmatprep.subr.mxu0 0.0
        %506 = vmatpush2.msra.mxu0 0.0
        %507 = vmatprep.subr.mxu0 0.0
        %508 = vmatpush2.msra.mxu0 0.0
        %509 = vmatprep.subr.mxu0 0.0
        %510 = vmatpush2.msra.mxu0 0.0
        %511 = vmatprep.subr.mxu0 0.0
        %512 = vmatpush2.msra.mxu0 0.0
        %513 = vmatprep.subr.mxu0 0.0
        %514 = vmatpush2.msra.mxu0 0.0
        %515 = vmatprep.subr.mxu0 0.0
        %516 = vmatpush2.msra.mxu0 0.0
        %517 = vmatprep.mubr.f32.mxu0 0.0
        %518 = vmatmul.mubr.f32.gmra.mxu0 %v262
        %v519 = vpop.f32.mrf.mxu0
        %v520 = vadd.f32 0.0, %v519
        %v521 = vpop.f32.mrf.mxu0
        %v522 = vadd.f32 0.0, %v521
        %523 = vmatprep.mubr.f32.mxu0 0.0
        %524 = vmatmul.mubr.f32.gmra.mxu0 %v265
        %v525 = vpop.f32.mrf.mxu0
        %v526 = vadd.f32 0.0, %v525
        %v527 = vpop.f32.mrf.mxu0
        %v528 = vadd.f32 0.0, %v527
        %529 = vmatprep.mubr.f32.mxu0 0.0
        %530 = vmatmul.mubr.f32.gmra.mxu0 %v268
        %v531 = vpop.f32.mrf.mxu0
        %v532 = vadd.f32 0.0, %v531
        %v533 = vpop.f32.mrf.mxu0
        %v534 = vadd.f32 0.0, %v533
        %535 = vmatprep.mubr.f32.mxu0 0.0
        %536 = vmatmul.mubr.f32.gmra.mxu0 %v271
        %v537 = vpop.f32.mrf.mxu0
        %v538 = vadd.f32 0.0, %v537
        %v539 = vpop.f32.mrf.mxu0
        %v540 = vadd.f32 0.0, %v539
        %541 = vmatprep.mubr.f32.mxu0 0.0
        %542 = vmatmul.mubr.f32.gmra.mxu0 %v274
        %v543 = vpop.f32.mrf.mxu0
        %v544 = vadd.f32 0.0, %v543
        %v545 = vpop.f32.mrf.mxu0
        %v546 = vadd.f32 0.0, %v545
        %547 = vmatprep.mubr.f32.mxu0 0.0
        %548 = vmatmul.mubr.f32.gmra.mxu0 %v277
        %v549 = vpop.f32.mrf.mxu0
        %v550 = vadd.f32 0.0, %v549
        %v551 = vpop.f32.mrf.mxu0
        %v552 = vadd.f32 0.0, %v551
        %553 = vmatprep.mubr.f32.mxu0 0.0
        %554 = vmatmul.mubr.f32.gmra.mxu0 %v280
        %v555 = vpop.f32.mrf.mxu0
        %v556 = vadd.f32 0.0, %v555
        %v557 = vpop.f32.mrf.mxu0
        %v558 = vadd.f32 0.0, %v557
        %559 = vmatprep.mubr.f32.mxu0 0.0
        %560 = vmatmul.mubr.f32.gmra.mxu0 %v283
        %v561 = vpop.f32.mrf.mxu0
        %v562 = vadd.f32 0.0, %v561
        %v563 = vpop.f32.mrf.mxu0
        %v564 = vadd.f32 0.0, %v563
        %565 = vmatprep.mubr.f32.mxu0 0.0
        %566 = vmatmul.mubr.f32.gmra.mxu0 %v286
        %v567 = vpop.f32.mrf.mxu0
        %v568 = vadd.f32 0.0, %v567
        %v569 = vpop.f32.mrf.mxu0
        %v570 = vadd.f32 0.0, %v569
        %571 = vmatprep.mubr.f32.mxu0 0.0
        %572 = vmatmul.mubr.f32.gmra.mxu0 %v289
        %v573 = vpop.f32.mrf.mxu0
        %v574 = vadd.f32 0.0, %v573
        %v575 = vpop.f32.mrf.mxu0
        %v576 = vadd.f32 0.0, %v575
        %577 = vmatprep.mubr.f32.mxu0 0.0
        %578 = vmatmul.mubr.f32.gmra.mxu0 %v292
        %v579 = vpop.f32.mrf.mxu0
        %v580 = vadd.f32 0.0, %v579
        %v581 = vpop.f32.mrf.mxu0
        %v582 = vadd.f32 0.0, %v581
        %583 = vmatprep.mubr.f32.mxu0 0.0
        %584 = vmatmul.mubr.f32.gmra.mxu0 %v295
        %v585 = vpop.f32.mrf.mxu0
        %v586 = vadd.f32 0.0, %v585
        %v587 = vpop.f32.mrf.mxu0
        %v588 = vadd.f32 0.0, %v587
        %589 = vmatprep.mubr.f32.mxu0 0.0
        %590 = vmatmul.mubr.f32.gmra.mxu0 %v298
        %v591 = vpop.f32.mrf.mxu0
        %v592 = vadd.f32 0.0, %v591
        %v593 = vpop.f32.mrf.mxu0
        %v594 = vadd.f32 0.0, %v593
        %595 = vmatprep.mubr.f32.mxu0 0.0
        %596 = vmatmul.mubr.f32.gmra.mxu0 %v301
        %v597 = vpop.f32.mrf.mxu0
        %v598 = vadd.f32 0.0, %v597
        %v599 = vpop.f32.mrf.mxu0
        %v600 = vadd.f32 0.0, %v599
        %601 = vmatprep.mubr.f32.mxu0 0.0
        %602 = vmatmul.mubr.f32.gmra.mxu0 %v304
        %v603 = vpop.f32.mrf.mxu0
        %v604 = vadd.f32 0.0, %v603
        %v605 = vpop.f32.mrf.mxu0
        %v606 = vadd.f32 0.0, %v605
        %607 = vmatprep.mubr.f32.mxu0 0.0
        %608 = vmatmul.mubr.f32.gmra.mxu0 %v307
        %v609 = vpop.f32.mrf.mxu0
        %v610 = vadd.f32 0.0, %v609
        %v611 = vpop.f32.mrf.mxu0
        %v612 = vadd.f32 0.0, %v611
        %613 = vmatprep.mubr.f32.mxu0 0.0
        %614 = vmatmul.mubr.f32.gmra.mxu0 %v310
        %v615 = vpop.f32.mrf.mxu0
        %v616 = vadd.f32 0.0, %v615
        %v617 = vpop.f32.mrf.mxu0
        %v618 = vadd.f32 0.0, %v617
        %619 = vmatprep.mubr.f32.mxu0 0.0
        %620 = vmatmul.mubr.f32.gmra.mxu0 %v313
        %v621 = vpop.f32.mrf.mxu0
        %v622 = vadd.f32 0.0, %v621
        %v623 = vpop.f32.mrf.mxu0
        %v624 = vadd.f32 0.0, %v623
        %625 = vmatprep.mubr.f32.mxu0 0.0
        %626 = vmatmul.mubr.f32.gmra.mxu0 %v316
        %v627 = vpop.f32.mrf.mxu0
        %v628 = vadd.f32 0.0, %v627
        %v629 = vpop.f32.mrf.mxu0
        %v630 = vadd.f32 0.0, %v629
        %631 = vmatprep.mubr.f32.mxu0 0.0
        %632 = vmatmul.mubr.f32.gmra.mxu0 %v319
        %v633 = vpop.f32.mrf.mxu0
        %v634 = vadd.f32 0.0, %v633
        %v635 = vpop.f32.mrf.mxu0
        %v636 = vadd.f32 0.0, %v635
        %637 = vmatprep.mubr.f32.mxu0 0.0
        %638 = vmatmul.mubr.f32.gmra.mxu0 %v322
        %v639 = vpop.f32.mrf.mxu0
        %v640 = vadd.f32 0.0, %v639
        %v641 = vpop.f32.mrf.mxu0
        %v642 = vadd.f32 0.0, %v641
        %643 = vmatprep.mubr.f32.mxu0 0.0
        %644 = vmatmul.mubr.f32.gmra.mxu0 %v325
        %v645 = vpop.f32.mrf.mxu0
        %v646 = vadd.f32 0.0, %v645
        %v647 = vpop.f32.mrf.mxu0
        %v648 = vadd.f32 0.0, %v647
        %649 = vmatprep.mubr.f32.mxu0 0.0
        %650 = vmatmul.mubr.f32.gmra.mxu0 %v328
        %v651 = vpop.f32.mrf.mxu0
        %v652 = vadd.f32 0.0, %v651
        %v653 = vpop.f32.mrf.mxu0
        %v654 = vadd.f32 0.0, %v653
        %655 = vmatprep.mubr.f32.mxu0 0.0
        %656 = vmatmul.mubr.f32.gmra.mxu0 %v331
        %v657 = vpop.f32.mrf.mxu0
        %v658 = vadd.f32 0.0, %v657
        %v659 = vpop.f32.mrf.mxu0
        %v660 = vadd.f32 0.0, %v659
        %661 = vmatprep.mubr.f32.mxu0 0.0
        %662 = vmatmul.mubr.f32.gmra.mxu0 %v334
        %v663 = vpop.f32.mrf.mxu0
        %v664 = vadd.f32 0.0, %v663
        %v665 = vpop.f32.mrf.mxu0
        %v666 = vadd.f32 0.0, %v665
        %667 = vmatprep.mubr.f32.mxu0 0.0
        %668 = vmatmul.mubr.f32.gmra.mxu0 %v337
        %v669 = vpop.f32.mrf.mxu0
        %v670 = vadd.f32 0.0, %v669
        %v671 = vpop.f32.mrf.mxu0
        %v672 = vadd.f32 0.0, %v671
        %673 = vmatprep.mubr.f32.mxu0 0.0
        %674 = vmatmul.mubr.f32.gmra.mxu0 %v340
        %v675 = vpop.f32.mrf.mxu0
        %v676 = vadd.f32 0.0, %v675
        %v677 = vpop.f32.mrf.mxu0
        %v678 = vadd.f32 0.0, %v677
        %679 = vmatprep.mubr.f32.mxu0 0.0
        %680 = vmatmul.mubr.f32.gmra.mxu0 %v343
        %v681 = vpop.f32.mrf.mxu0
        %v682 = vadd.f32 0.0, %v681
        %v683 = vpop.f32.mrf.mxu0
        %v684 = vadd.f32 0.0, %v683
        %685 = vmatprep.mubr.f32.mxu0 0.0
        %686 = vmatmul.mubr.f32.gmra.mxu0 %v346
        %v687 = vpop.f32.mrf.mxu0
        %v688 = vadd.f32 0.0, %v687
        %v689 = vpop.f32.mrf.mxu0
        %v690 = vadd.f32 0.0, %v689
        %691 = vmatprep.mubr.f32.mxu0 0.0
        %692 = vmatmul.mubr.f32.gmra.mxu0 %v349
        %v693 = vpop.f32.mrf.mxu0
        %v694 = vadd.f32 0.0, %v693
        %v695 = vpop.f32.mrf.mxu0
        %v696 = vadd.f32 0.0, %v695
        %697 = vmatprep.mubr.f32.mxu0 0.0
        %698 = vmatmul.mubr.f32.gmra.mxu0 %v352
        %v699 = vpop.f32.mrf.mxu0
        %v700 = vadd.f32 0.0, %v699
        %v701 = vpop.f32.mrf.mxu0
        %v702 = vadd.f32 0.0, %v701
        %703 = vmatprep.mubr.f32.mxu0 0.0
        %704 = vmatmul.mubr.f32.gmra.mxu0 %v355
        %v705 = vpop.f32.mrf.mxu0
        %v706 = vadd.f32 0.0, %v705
        %v707 = vpop.f32.mrf.mxu0
        %v708 = vadd.f32 0.0, %v707
        %709 = vmatprep.mubr.f32.mxu0 0.0
        %710 = vmatmul.mubr.f32.gmra.mxu0 %v358
        %v711 = vpop.f32.mrf.mxu0
        %v712 = vadd.f32 0.0, %v711
        %v713 = vpop.f32.mrf.mxu0
        %v714 = vadd.f32 0.0, %v713
        %715 = vmatprep.mubr.f32.mxu0 0.0
        %716 = vmatmul.mubr.f32.gmra.mxu0 %v361
        %v717 = vpop.f32.mrf.mxu0
        %v718 = vadd.f32 0.0, %v717
        %v719 = vpop.f32.mrf.mxu0
        %v720 = vadd.f32 0.0, %v719
        %721 = vmatprep.mubr.f32.mxu0 0.0
        %722 = vmatmul.mubr.f32.gmra.mxu0 %v364
        %v723 = vpop.f32.mrf.mxu0
        %v724 = vadd.f32 0.0, %v723
        %v725 = vpop.f32.mrf.mxu0
        %v726 = vadd.f32 0.0, %v725
        %727 = vmatprep.mubr.f32.mxu0 0.0
        %728 = vmatmul.mubr.f32.gmra.mxu0 %v367
        %v729 = vpop.f32.mrf.mxu0
        %v730 = vadd.f32 0.0, %v729
        %v731 = vpop.f32.mrf.mxu0
        %v732 = vadd.f32 0.0, %v731
        %733 = vmatprep.mubr.f32.mxu0 0.0
        %734 = vmatmul.mubr.f32.gmra.mxu0 %v370
        %v735 = vpop.f32.mrf.mxu0
        %v736 = vadd.f32 0.0, %v735
        %v737 = vpop.f32.mrf.mxu0
        %v738 = vadd.f32 0.0, %v737
        %739 = vmatprep.mubr.f32.mxu0 0.0
        %740 = vmatmul.mubr.f32.gmra.mxu0 %v373
        %v741 = vpop.f32.mrf.mxu0
        %v742 = vadd.f32 0.0, %v741
        %v743 = vpop.f32.mrf.mxu0
        %v744 = vadd.f32 0.0, %v743
        %745 = vmatprep.mubr.f32.mxu0 0.0
        %746 = vmatmul.mubr.f32.gmra.mxu0 %v376
        %v747 = vpop.f32.mrf.mxu0
        %v748 = vadd.f32 0.0, %v747
        %v749 = vpop.f32.mrf.mxu0
        %v750 = vadd.f32 0.0, %v749
        %751 = vmatprep.mubr.f32.mxu0 0.0
        %752 = vmatmul.mubr.f32.gmra.mxu0 %v379
        %v753 = vpop.f32.mrf.mxu0
        %v754 = vadd.f32 0.0, %v753
        %v755 = vpop.f32.mrf.mxu0
        %v756 = vadd.f32 0.0, %v755
        %757 = vmatprep.mubr.f32.mxu0 0.0
        %758 = vmatmul.mubr.f32.gmra.mxu0 %v382
        %v759 = vpop.f32.mrf.mxu0
        %v760 = vadd.f32 0.0, %v759
        %v761 = vpop.f32.mrf.mxu0
        %v762 = vadd.f32 0.0, %v761
        %763 = vmatprep.mubr.f32.mxu0 0.0
        %764 = vmatmul.mubr.f32.gmra.mxu0 %v385
        %v765 = vpop.f32.mrf.mxu0
        %v766 = vadd.f32 0.0, %v765
        %v767 = vpop.f32.mrf.mxu0
        %v768 = vadd.f32 0.0, %v767
        %769 = vmatprep.mubr.f32.mxu0 0.0
        %770 = vmatmul.mubr.f32.gmra.mxu0 %v388
        %v771 = vpop.f32.mrf.mxu0
        %v772 = vadd.f32 0.0, %v771
        %v773 = vpop.f32.mrf.mxu0
        %v774 = vadd.f32 0.0, %v773
        %775 = vmatprep.mubr.f32.mxu0 0.0
        %776 = vmatmul.mubr.f32.gmra.mxu0 %v391
        %v777 = vpop.f32.mrf.mxu0
        %v778 = vadd.f32 0.0, %v777
        %v779 = vpop.f32.mrf.mxu0
        %v780 = vadd.f32 0.0, %v779
        %781 = vmatprep.mubr.f32.mxu0 0.0
        %782 = vmatmul.mubr.f32.gmra.mxu0 %v394
        %v783 = vpop.f32.mrf.mxu0
        %v784 = vadd.f32 0.0, %v783
        %v785 = vpop.f32.mrf.mxu0
        %v786 = vadd.f32 0.0, %v785
        %787 = vmatprep.mubr.f32.mxu0 0.0
        %788 = vmatmul.mubr.f32.gmra.mxu0 %v397
        %v789 = vpop.f32.mrf.mxu0
        %v790 = vadd.f32 0.0, %v789
        %v791 = vpop.f32.mrf.mxu0
        %v792 = vadd.f32 0.0, %v791
        %793 = vmatprep.mubr.f32.mxu0 0.0
        %794 = vmatmul.mubr.f32.gmra.mxu0 %v400
        %v795 = vpop.f32.mrf.mxu0
        %v796 = vadd.f32 0.0, %v795
        %v797 = vpop.f32.mrf.mxu0
        %v798 = vadd.f32 0.0, %v797
        %799 = vmatprep.mubr.f32.mxu0 0.0
        %800 = vmatmul.mubr.f32.gmra.mxu0 %v403
        %v801 = vpop.f32.mrf.mxu0
        %v802 = vadd.f32 0.0, %v801
        %v803 = vpop.f32.mrf.mxu0
        %v804 = vadd.f32 0.0, %v803
        %805 = vmatprep.mubr.f32.mxu0 0.0
        %806 = vmatmul.mubr.f32.gmra.mxu0 %v406
        %v807 = vpop.f32.mrf.mxu0
        %v808 = vadd.f32 0.0, %v807
        %v809 = vpop.f32.mrf.mxu0
        %v810 = vadd.f32 0.0, %v809
        %811 = vmatprep.mubr.f32.mxu0 0.0
        %812 = vmatmul.mubr.f32.gmra.mxu0 %v409
        %v813 = vpop.f32.mrf.mxu0
        %v814 = vadd.f32 0.0, %v813
        %v815 = vpop.f32.mrf.mxu0
        %v816 = vadd.f32 0.0, %v815
        %817 = vmatprep.mubr.f32.mxu0 0.0
        %818 = vmatmul.mubr.f32.gmra.mxu0 %v412
        %v819 = vpop.f32.mrf.mxu0
        %v820 = vadd.f32 0.0, %v819
        %v821 = vpop.f32.mrf.mxu0
        %v822 = vadd.f32 0.0, %v821
        %823 = vmatprep.mubr.f32.mxu0 0.0
        %824 = vmatmul.mubr.f32.gmra.mxu0 %v415
        %v825 = vpop.f32.mrf.mxu0
        %v826 = vadd.f32 0.0, %v825
        %v827 = vpop.f32.mrf.mxu0
        %v828 = vadd.f32 0.0, %v827
        %829 = vmatprep.mubr.f32.mxu0 0.0
        %830 = vmatmul.mubr.f32.gmra.mxu0 %v418
        %v831 = vpop.f32.mrf.mxu0
        %v832 = vadd.f32 0.0, %v831
        %v833 = vpop.f32.mrf.mxu0
        %v834 = vadd.f32 0.0, %v833
        %835 = vmatprep.mubr.f32.mxu0 0.0
        %836 = vmatmul.mubr.f32.gmra.mxu0 %v421
        %v837 = vpop.f32.mrf.mxu0
        %v838 = vadd.f32 0.0, %v837
        %v839 = vpop.f32.mrf.mxu0
        %v840 = vadd.f32 0.0, %v839
        %841 = vmatprep.mubr.f32.mxu0 0.0
        %842 = vmatmul.mubr.f32.gmra.mxu0 %v424
        %v843 = vpop.f32.mrf.mxu0
        %v844 = vadd.f32 0.0, %v843
        %v845 = vpop.f32.mrf.mxu0
        %v846 = vadd.f32 0.0, %v845
        %847 = vmatprep.mubr.f32.mxu0 0.0
        %848 = vmatmul.mubr.f32.gmra.mxu0 %v427
        %v849 = vpop.f32.mrf.mxu0
        %v850 = vadd.f32 0.0, %v849
        %v851 = vpop.f32.mrf.mxu0
        %v852 = vadd.f32 0.0, %v851
        %853 = vmatprep.mubr.f32.mxu0 0.0
        %854 = vmatmul.mubr.f32.gmra.mxu0 %v430
        %v855 = vpop.f32.mrf.mxu0
        %v856 = vadd.f32 0.0, %v855
        %v857 = vpop.f32.mrf.mxu0
        %v858 = vadd.f32 0.0, %v857
        %859 = vmatprep.mubr.f32.mxu0 0.0
        %860 = vmatmul.mubr.f32.gmra.mxu0 %v433
        %v861 = vpop.f32.mrf.mxu0
        %v862 = vadd.f32 0.0, %v861
        %v863 = vpop.f32.mrf.mxu0
        %v864 = vadd.f32 0.0, %v863
        %865 = vmatprep.mubr.f32.mxu0 0.0
        %866 = vmatmul.mubr.f32.gmra.mxu0 %v436
        %v867 = vpop.f32.mrf.mxu0
        %v868 = vadd.f32 0.0, %v867
        %v869 = vpop.f32.mrf.mxu0
        %v870 = vadd.f32 0.0, %v869
        %871 = vmatprep.mubr.f32.mxu0 0.0
        %872 = vmatmul.mubr.f32.gmra.mxu0 %v439
        %v873 = vpop.f32.mrf.mxu0
        %v874 = vadd.f32 0.0, %v873
        %v875 = vpop.f32.mrf.mxu0
        %v876 = vadd.f32 0.0, %v875
        %877 = vmatprep.mubr.f32.mxu0 0.0
        %878 = vmatmul.mubr.f32.gmra.mxu0 %v442
        %v879 = vpop.f32.mrf.mxu0
        %v880 = vadd.f32 0.0, %v879
        %v881 = vpop.f32.mrf.mxu0
        %v882 = vadd.f32 0.0, %v881
        %883 = vmatprep.mubr.f32.mxu0 0.0
        %884 = vmatmul.mubr.f32.gmra.mxu0 %v445
        %v885 = vpop.f32.mrf.mxu0
        %v886 = vadd.f32 0.0, %v885
        %v887 = vpop.f32.mrf.mxu0
        %v888 = vadd.f32 0.0, %v887
        %889 = vmatprep.mubr.f32.mxu0 0.0
        %890 = vmatmul.mubr.f32.gmra.mxu0 %v448
        %v891 = vpop.f32.mrf.mxu0
        %v892 = vadd.f32 0.0, %v891
        %v893 = vpop.f32.mrf.mxu0
        %v894 = vadd.f32 0.0, %v893
        %895 = vmatprep.mubr.f32.mxu0 0.0
        %896 = vmatmul.mubr.f32.gmra.mxu0 %v451
        %v897 = vpop.f32.mrf.mxu0
        %v898 = vadd.f32 0.0, %v897
        %v899 = vpop.f32.mrf.mxu0
        %v900 = vadd.f32 0.0, %v899
        %901 = vdwg.mxu0
        %902 = vmatprep.subr.mxu0 0.0
        %903 = vmatpush1.msra.mxu0 0.0
        %904 = vmatprep.subr.mxu0 0.0
        %905 = vmatpush1.msra.mxu0 0.0
        %906 = vmatprep.subr.mxu0 0.0
        %907 = vmatpush1.msra.mxu0 0.0
        %908 = vmatprep.subr.mxu0 0.0
        %909 = vmatpush1.msra.mxu0 0.0
        %910 = vmatprep.subr.mxu0 0.0
        %911 = vmatpush1.msra.mxu0 0.0
        %912 = vmatprep.subr.mxu0 0.0
        %913 = vmatpush1.msra.mxu0 0.0
        %914 = vmatprep.subr.mxu0 0.0
        %915 = vmatpush1.msra.mxu0 0.0
        %916 = vmatprep.subr.mxu0 0.0
        %917 = vmatpush1.msra.mxu0 0.0
        %918 = vmatprep.subr.mxu0 0.0
        %919 = vmatpush1.msra.mxu0 0.0
        %920 = vmatprep.subr.mxu0 0.0
        %921 = vmatpush1.msra.mxu0 0.0
        %922 = vmatprep.subr.mxu0 0.0
        %923 = vmatpush1.msra.mxu0 0.0
        %924 = vmatprep.subr.mxu0 0.0
        %925 = vmatpush1.msra.mxu0 0.0
        %926 = vmatprep.subr.mxu0 0.0
        %927 = vmatpush1.msra.mxu0 0.0
        %928 = vmatprep.subr.mxu0 0.0
        %929 = vmatpush1.msra.mxu0 0.0
        %930 = vmatprep.subr.mxu0 0.0
        %931 = vmatpush1.msra.mxu0 0.0
        %932 = vmatprep.subr.mxu0 %v195
        %933 = vmatpush1.msra.mxu0 %v194
        %934 = vmatprep.subr.mxu0 0.0
        %935 = vmatpush2.msra.mxu0 0.0
        %936 = vmatprep.subr.mxu0 0.0
        %937 = vmatpush2.msra.mxu0 0.0
        %938 = vmatprep.subr.mxu0 0.0
        %939 = vmatpush2.msra.mxu0 0.0
        %940 = vmatprep.subr.mxu0 0.0
        %941 = vmatpush2.msra.mxu0 0.0
        %942 = vmatprep.subr.mxu0 0.0
        %943 = vmatpush2.msra.mxu0 0.0
        %944 = vmatprep.subr.mxu0 0.0
        %945 = vmatpush2.msra.mxu0 0.0
        %946 = vmatprep.subr.mxu0 0.0
        %947 = vmatpush2.msra.mxu0 0.0
        %948 = vmatprep.subr.mxu0 0.0
        %949 = vmatpush2.msra.mxu0 0.0
        %950 = vmatprep.subr.mxu0 0.0
        %951 = vmatpush2.msra.mxu0 0.0
        %952 = vmatprep.subr.mxu0 0.0
        %953 = vmatpush2.msra.mxu0 0.0
        %954 = vmatprep.subr.mxu0 0.0
        %955 = vmatpush2.msra.mxu0 0.0
        %956 = vmatprep.subr.mxu0 0.0
        %957 = vmatpush2.msra.mxu0 0.0
        %958 = vmatprep.subr.mxu0 0.0
        %959 = vmatpush2.msra.mxu0 0.0
        %960 = vmatprep.subr.mxu0 0.0
        %961 = vmatpush2.msra.mxu0 0.0
        %962 = vmatprep.subr.mxu0 0.0
        %963 = vmatpush2.msra.mxu0 0.0
        %964 = vmatprep.subr.mxu0 0.0
        %965 = vmatpush2.msra.mxu0 0.0
        %966 = vmatprep.mubr.f32.mxu0 0.0
        %967 = vmatmul.mubr.f32.gmra.mxu0 %v262
        %v968 = vpop.f32.mrf.mxu0
        %v969 = vadd.f32 0.0, %v968
        %v970 = vpop.f32.mrf.mxu0
        %v971 = vadd.f32 0.0, %v970
        %972 = vmatprep.mubr.f32.mxu0 0.0
        %973 = vmatmul.mubr.f32.gmra.mxu0 %v265
        %v974 = vpop.f32.mrf.mxu0
        %v975 = vadd.f32 0.0, %v974
        %v976 = vpop.f32.mrf.mxu0
        %v977 = vadd.f32 0.0, %v976
        %978 = vmatprep.mubr.f32.mxu0 0.0
        %979 = vmatmul.mubr.f32.gmra.mxu0 %v268
        %v980 = vpop.f32.mrf.mxu0
        %v981 = vadd.f32 0.0, %v980
        %v982 = vpop.f32.mrf.mxu0
        %v983 = vadd.f32 0.0, %v982
        %984 = vmatprep.mubr.f32.mxu0 0.0
        %985 = vmatmul.mubr.f32.gmra.mxu0 %v271
        %v986 = vpop.f32.mrf.mxu0
        %v987 = vadd.f32 0.0, %v986
        %v988 = vpop.f32.mrf.mxu0
        %v989 = vadd.f32 0.0, %v988
        %990 = vmatprep.mubr.f32.mxu0 0.0
        %991 = vmatmul.mubr.f32.gmra.mxu0 %v274
        %v992 = vpop.f32.mrf.mxu0
        %v993 = vadd.f32 0.0, %v992
        %v994 = vpop.f32.mrf.mxu0
        %v995 = vadd.f32 0.0, %v994
        %996 = vmatprep.mubr.f32.mxu0 0.0
        %997 = vmatmul.mubr.f32.gmra.mxu0 %v277
        %v998 = vpop.f32.mrf.mxu0
        %v999 = vadd.f32 0.0, %v998
        %v1000 = vpop.f32.mrf.mxu0
        %v1001 = vadd.f32 0.0, %v1000
        %1002 = vmatprep.mubr.f32.mxu0 0.0
        %1003 = vmatmul.mubr.f32.gmra.mxu0 %v280
        %v1004 = vpop.f32.mrf.mxu0
        %v1005 = vadd.f32 0.0, %v1004
        %v1006 = vpop.f32.mrf.mxu0
        %v1007 = vadd.f32 0.0, %v1006
        %1008 = vmatprep.mubr.f32.mxu0 0.0
        %1009 = vmatmul.mubr.f32.gmra.mxu0 %v283
        %v1010 = vpop.f32.mrf.mxu0
        %v1011 = vadd.f32 0.0, %v1010
        %v1012 = vpop.f32.mrf.mxu0
        %v1013 = vadd.f32 0.0, %v1012
        %1014 = vmatprep.mubr.f32.mxu0 0.0
        %1015 = vmatmul.mubr.f32.gmra.mxu0 %v286
        %v1016 = vpop.f32.mrf.mxu0
        %v1017 = vadd.f32 0.0, %v1016
        %v1018 = vpop.f32.mrf.mxu0
        %v1019 = vadd.f32 0.0, %v1018
        %1020 = vmatprep.mubr.f32.mxu0 0.0
        %1021 = vmatmul.mubr.f32.gmra.mxu0 %v289
        %v1022 = vpop.f32.mrf.mxu0
        %v1023 = vadd.f32 0.0, %v1022
        %v1024 = vpop.f32.mrf.mxu0
        %v1025 = vadd.f32 0.0, %v1024
        %1026 = vmatprep.mubr.f32.mxu0 0.0
        %1027 = vmatmul.mubr.f32.gmra.mxu0 %v292
        %v1028 = vpop.f32.mrf.mxu0
        %v1029 = vadd.f32 0.0, %v1028
        %v1030 = vpop.f32.mrf.mxu0
        %v1031 = vadd.f32 0.0, %v1030
        %1032 = vmatprep.mubr.f32.mxu0 0.0
        %1033 = vmatmul.mubr.f32.gmra.mxu0 %v295
        %v1034 = vpop.f32.mrf.mxu0
        %v1035 = vadd.f32 0.0, %v1034
        %v1036 = vpop.f32.mrf.mxu0
        %v1037 = vadd.f32 0.0, %v1036
        %1038 = vmatprep.mubr.f32.mxu0 0.0
        %1039 = vmatmul.mubr.f32.gmra.mxu0 %v298
        %v1040 = vpop.f32.mrf.mxu0
        %v1041 = vadd.f32 0.0, %v1040
        %v1042 = vpop.f32.mrf.mxu0
        %v1043 = vadd.f32 0.0, %v1042
        %1044 = vmatprep.mubr.f32.mxu0 0.0
        %1045 = vmatmul.mubr.f32.gmra.mxu0 %v301
        %v1046 = vpop.f32.mrf.mxu0
        %v1047 = vadd.f32 0.0, %v1046
        %v1048 = vpop.f32.mrf.mxu0
        %v1049 = vadd.f32 0.0, %v1048
        %1050 = vmatprep.mubr.f32.mxu0 0.0
        %1051 = vmatmul.mubr.f32.gmra.mxu0 %v304
        %v1052 = vpop.f32.mrf.mxu0
        %v1053 = vadd.f32 0.0, %v1052
        %v1054 = vpop.f32.mrf.mxu0
        %v1055 = vadd.f32 0.0, %v1054
        %1056 = vmatprep.mubr.f32.mxu0 0.0
        %1057 = vmatmul.mubr.f32.gmra.mxu0 %v307
        %v1058 = vpop.f32.mrf.mxu0
        %v1059 = vadd.f32 0.0, %v1058
        %v1060 = vpop.f32.mrf.mxu0
        %v1061 = vadd.f32 0.0, %v1060
        %1062 = vmatprep.mubr.f32.mxu0 0.0
        %1063 = vmatmul.mubr.f32.gmra.mxu0 %v310
        %v1064 = vpop.f32.mrf.mxu0
        %v1065 = vadd.f32 0.0, %v1064
        %v1066 = vpop.f32.mrf.mxu0
        %v1067 = vadd.f32 0.0, %v1066
        %1068 = vmatprep.mubr.f32.mxu0 0.0
        %1069 = vmatmul.mubr.f32.gmra.mxu0 %v313
        %v1070 = vpop.f32.mrf.mxu0
        %v1071 = vadd.f32 0.0, %v1070
        %v1072 = vpop.f32.mrf.mxu0
        %v1073 = vadd.f32 0.0, %v1072
        %1074 = vmatprep.mubr.f32.mxu0 0.0
        %1075 = vmatmul.mubr.f32.gmra.mxu0 %v316
        %v1076 = vpop.f32.mrf.mxu0
        %v1077 = vadd.f32 0.0, %v1076
        %v1078 = vpop.f32.mrf.mxu0
        %v1079 = vadd.f32 0.0, %v1078
        %1080 = vmatprep.mubr.f32.mxu0 0.0
        %1081 = vmatmul.mubr.f32.gmra.mxu0 %v319
        %v1082 = vpop.f32.mrf.mxu0
        %v1083 = vadd.f32 0.0, %v1082
        %v1084 = vpop.f32.mrf.mxu0
        %v1085 = vadd.f32 0.0, %v1084
        %1086 = vmatprep.mubr.f32.mxu0 0.0
        %1087 = vmatmul.mubr.f32.gmra.mxu0 %v322
        %v1088 = vpop.f32.mrf.mxu0
        %v1089 = vadd.f32 0.0, %v1088
        %v1090 = vpop.f32.mrf.mxu0
        %v1091 = vadd.f32 0.0, %v1090
        %1092 = vmatprep.mubr.f32.mxu0 0.0
        %1093 = vmatmul.mubr.f32.gmra.mxu0 %v325
        %v1094 = vpop.f32.mrf.mxu0
        %v1095 = vadd.f32 0.0, %v1094
        %v1096 = vpop.f32.mrf.mxu0
        %v1097 = vadd.f32 0.0, %v1096
        %1098 = vmatprep.mubr.f32.mxu0 0.0
        %1099 = vmatmul.mubr.f32.gmra.mxu0 %v328
        %v1100 = vpop.f32.mrf.mxu0
        %v1101 = vadd.f32 0.0, %v1100
        %v1102 = vpop.f32.mrf.mxu0
        %v1103 = vadd.f32 0.0, %v1102
        %1104 = vmatprep.mubr.f32.mxu0 0.0
        %1105 = vmatmul.mubr.f32.gmra.mxu0 %v331
        %v1106 = vpop.f32.mrf.mxu0
        %v1107 = vadd.f32 0.0, %v1106
        %v1108 = vpop.f32.mrf.mxu0
        %v1109 = vadd.f32 0.0, %v1108
        %1110 = vmatprep.mubr.f32.mxu0 0.0
        %1111 = vmatmul.mubr.f32.gmra.mxu0 %v334
        %v1112 = vpop.f32.mrf.mxu0
        %v1113 = vadd.f32 0.0, %v1112
        %v1114 = vpop.f32.mrf.mxu0
        %v1115 = vadd.f32 0.0, %v1114
        %1116 = vmatprep.mubr.f32.mxu0 0.0
        %1117 = vmatmul.mubr.f32.gmra.mxu0 %v337
        %v1118 = vpop.f32.mrf.mxu0
        %v1119 = vadd.f32 0.0, %v1118
        %v1120 = vpop.f32.mrf.mxu0
        %v1121 = vadd.f32 0.0, %v1120
        %1122 = vmatprep.mubr.f32.mxu0 0.0
        %1123 = vmatmul.mubr.f32.gmra.mxu0 %v340
        %v1124 = vpop.f32.mrf.mxu0
        %v1125 = vadd.f32 0.0, %v1124
        %v1126 = vpop.f32.mrf.mxu0
        %v1127 = vadd.f32 0.0, %v1126
        %1128 = vmatprep.mubr.f32.mxu0 0.0
        %1129 = vmatmul.mubr.f32.gmra.mxu0 %v343
        %v1130 = vpop.f32.mrf.mxu0
        %v1131 = vadd.f32 0.0, %v1130
        %v1132 = vpop.f32.mrf.mxu0
        %v1133 = vadd.f32 0.0, %v1132
        %1134 = vmatprep.mubr.f32.mxu0 0.0
        %1135 = vmatmul.mubr.f32.gmra.mxu0 %v346
        %v1136 = vpop.f32.mrf.mxu0
        %v1137 = vadd.f32 0.0, %v1136
        %v1138 = vpop.f32.mrf.mxu0
        %v1139 = vadd.f32 0.0, %v1138
        %1140 = vmatprep.mubr.f32.mxu0 0.0
        %1141 = vmatmul.mubr.f32.gmra.mxu0 %v349
        %v1142 = vpop.f32.mrf.mxu0
        %v1143 = vadd.f32 0.0, %v1142
        %v1144 = vpop.f32.mrf.mxu0
        %v1145 = vadd.f32 0.0, %v1144
        %1146 = vmatprep.mubr.f32.mxu0 0.0
        %1147 = vmatmul.mubr.f32.gmra.mxu0 %v352
        %v1148 = vpop.f32.mrf.mxu0
        %v1149 = vadd.f32 0.0, %v1148
        %v1150 = vpop.f32.mrf.mxu0
        %v1151 = vadd.f32 0.0, %v1150
        %1152 = vmatprep.mubr.f32.mxu0 0.0
        %1153 = vmatmul.mubr.f32.gmra.mxu0 %v355
        %v1154 = vpop.f32.mrf.mxu0
        %v1155 = vadd.f32 0.0, %v1154
        %v1156 = vpop.f32.mrf.mxu0
        %v1157 = vadd.f32 0.0, %v1156
        %1158 = vmatprep.mubr.f32.mxu0 0.0
        %1159 = vmatmul.mubr.f32.gmra.mxu0 %v358
        %v1160 = vpop.f32.mrf.mxu0
        %v1161 = vadd.f32 0.0, %v1160
        %v1162 = vpop.f32.mrf.mxu0
        %v1163 = vadd.f32 0.0, %v1162
        %1164 = vmatprep.mubr.f32.mxu0 0.0
        %1165 = vmatmul.mubr.f32.gmra.mxu0 %v361
        %v1166 = vpop.f32.mrf.mxu0
        %v1167 = vadd.f32 0.0, %v1166
        %v1168 = vpop.f32.mrf.mxu0
        %v1169 = vadd.f32 0.0, %v1168
        %1170 = vmatprep.mubr.f32.mxu0 0.0
        %1171 = vmatmul.mubr.f32.gmra.mxu0 %v364
        %v1172 = vpop.f32.mrf.mxu0
        %v1173 = vadd.f32 0.0, %v1172
        %v1174 = vpop.f32.mrf.mxu0
        %v1175 = vadd.f32 0.0, %v1174
        %1176 = vmatprep.mubr.f32.mxu0 0.0
        %1177 = vmatmul.mubr.f32.gmra.mxu0 %v367
        %v1178 = vpop.f32.mrf.mxu0
        %v1179 = vadd.f32 0.0, %v1178
        %v1180 = vpop.f32.mrf.mxu0
        %v1181 = vadd.f32 0.0, %v1180
        %1182 = vmatprep.mubr.f32.mxu0 0.0
        %1183 = vmatmul.mubr.f32.gmra.mxu0 %v370
        %v1184 = vpop.f32.mrf.mxu0
        %v1185 = vadd.f32 0.0, %v1184
        %v1186 = vpop.f32.mrf.mxu0
        %v1187 = vadd.f32 0.0, %v1186
        %1188 = vmatprep.mubr.f32.mxu0 0.0
        %1189 = vmatmul.mubr.f32.gmra.mxu0 %v373
        %v1190 = vpop.f32.mrf.mxu0
        %v1191 = vadd.f32 0.0, %v1190
        %v1192 = vpop.f32.mrf.mxu0
        %v1193 = vadd.f32 0.0, %v1192
        %1194 = vmatprep.mubr.f32.mxu0 0.0
        %1195 = vmatmul.mubr.f32.gmra.mxu0 %v376
        %v1196 = vpop.f32.mrf.mxu0
        %v1197 = vadd.f32 0.0, %v1196
        %v1198 = vpop.f32.mrf.mxu0
        %v1199 = vadd.f32 0.0, %v1198
        %1200 = vmatprep.mubr.f32.mxu0 0.0
        %1201 = vmatmul.mubr.f32.gmra.mxu0 %v379
        %v1202 = vpop.f32.mrf.mxu0
        %v1203 = vadd.f32 0.0, %v1202
        %v1204 = vpop.f32.mrf.mxu0
        %v1205 = vadd.f32 0.0, %v1204
        %1206 = vmatprep.mubr.f32.mxu0 0.0
        %1207 = vmatmul.mubr.f32.gmra.mxu0 %v382
        %v1208 = vpop.f32.mrf.mxu0
        %v1209 = vadd.f32 0.0, %v1208
        %v1210 = vpop.f32.mrf.mxu0
        %v1211 = vadd.f32 0.0, %v1210
        %1212 = vmatprep.mubr.f32.mxu0 0.0
        %1213 = vmatmul.mubr.f32.gmra.mxu0 %v385
        %v1214 = vpop.f32.mrf.mxu0
        %v1215 = vadd.f32 0.0, %v1214
        %v1216 = vpop.f32.mrf.mxu0
        %v1217 = vadd.f32 0.0, %v1216
        %1218 = vmatprep.mubr.f32.mxu0 0.0
        %1219 = vmatmul.mubr.f32.gmra.mxu0 %v388
        %v1220 = vpop.f32.mrf.mxu0
        %v1221 = vadd.f32 0.0, %v1220
        %v1222 = vpop.f32.mrf.mxu0
        %v1223 = vadd.f32 0.0, %v1222
        %1224 = vmatprep.mubr.f32.mxu0 0.0
        %1225 = vmatmul.mubr.f32.gmra.mxu0 %v391
        %v1226 = vpop.f32.mrf.mxu0
        %v1227 = vadd.f32 0.0, %v1226
        %v1228 = vpop.f32.mrf.mxu0
        %v1229 = vadd.f32 0.0, %v1228
        %1230 = vmatprep.mubr.f32.mxu0 0.0
        %1231 = vmatmul.mubr.f32.gmra.mxu0 %v394
        %v1232 = vpop.f32.mrf.mxu0
        %v1233 = vadd.f32 0.0, %v1232
        %v1234 = vpop.f32.mrf.mxu0
        %v1235 = vadd.f32 0.0, %v1234
        %1236 = vmatprep.mubr.f32.mxu0 0.0
        %1237 = vmatmul.mubr.f32.gmra.mxu0 %v397
        %v1238 = vpop.f32.mrf.mxu0
        %v1239 = vadd.f32 0.0, %v1238
        %v1240 = vpop.f32.mrf.mxu0
        %v1241 = vadd.f32 0.0, %v1240
        %1242 = vmatprep.mubr.f32.mxu0 0.0
        %1243 = vmatmul.mubr.f32.gmra.mxu0 %v400
        %v1244 = vpop.f32.mrf.mxu0
        %v1245 = vadd.f32 0.0, %v1244
        %v1246 = vpop.f32.mrf.mxu0
        %v1247 = vadd.f32 0.0, %v1246
        %1248 = vmatprep.mubr.f32.mxu0 0.0
        %1249 = vmatmul.mubr.f32.gmra.mxu0 %v403
        %v1250 = vpop.f32.mrf.mxu0
        %v1251 = vadd.f32 0.0, %v1250
        %v1252 = vpop.f32.mrf.mxu0
        %v1253 = vadd.f32 0.0, %v1252
        %1254 = vmatprep.mubr.f32.mxu0 0.0
        %1255 = vmatmul.mubr.f32.gmra.mxu0 %v406
        %v1256 = vpop.f32.mrf.mxu0
        %v1257 = vadd.f32 0.0, %v1256
        %v1258 = vpop.f32.mrf.mxu0
        %v1259 = vadd.f32 0.0, %v1258
        %1260 = vmatprep.mubr.f32.mxu0 0.0
        %1261 = vmatmul.mubr.f32.gmra.mxu0 %v409
        %v1262 = vpop.f32.mrf.mxu0
        %v1263 = vadd.f32 0.0, %v1262
        %v1264 = vpop.f32.mrf.mxu0
        %v1265 = vadd.f32 0.0, %v1264
        %1266 = vmatprep.mubr.f32.mxu0 0.0
        %1267 = vmatmul.mubr.f32.gmra.mxu0 %v412
        %v1268 = vpop.f32.mrf.mxu0
        %v1269 = vadd.f32 0.0, %v1268
        %v1270 = vpop.f32.mrf.mxu0
        %v1271 = vadd.f32 0.0, %v1270
        %1272 = vmatprep.mubr.f32.mxu0 0.0
        %1273 = vmatmul.mubr.f32.gmra.mxu0 %v415
        %v1274 = vpop.f32.mrf.mxu0
        %v1275 = vadd.f32 0.0, %v1274
        %v1276 = vpop.f32.mrf.mxu0
        %v1277 = vadd.f32 0.0, %v1276
        %1278 = vmatprep.mubr.f32.mxu0 0.0
        %1279 = vmatmul.mubr.f32.gmra.mxu0 %v418
        %v1280 = vpop.f32.mrf.mxu0
        %v1281 = vadd.f32 0.0, %v1280
        %v1282 = vpop.f32.mrf.mxu0
        %v1283 = vadd.f32 0.0, %v1282
        %1284 = vmatprep.mubr.f32.mxu0 0.0
        %1285 = vmatmul.mubr.f32.gmra.mxu0 %v421
        %v1286 = vpop.f32.mrf.mxu0
        %v1287 = vadd.f32 0.0, %v1286
        %v1288 = vpop.f32.mrf.mxu0
        %v1289 = vadd.f32 0.0, %v1288
        %1290 = vmatprep.mubr.f32.mxu0 0.0
        %1291 = vmatmul.mubr.f32.gmra.mxu0 %v424
        %v1292 = vpop.f32.mrf.mxu0
        %v1293 = vadd.f32 0.0, %v1292
        %v1294 = vpop.f32.mrf.mxu0
        %v1295 = vadd.f32 0.0, %v1294
        %1296 = vmatprep.mubr.f32.mxu0 0.0
        %1297 = vmatmul.mubr.f32.gmra.mxu0 %v427
        %v1298 = vpop.f32.mrf.mxu0
        %v1299 = vadd.f32 0.0, %v1298
        %v1300 = vpop.f32.mrf.mxu0
        %v1301 = vadd.f32 0.0, %v1300
        %1302 = vmatprep.mubr.f32.mxu0 0.0
        %1303 = vmatmul.mubr.f32.gmra.mxu0 %v430
        %v1304 = vpop.f32.mrf.mxu0
        %v1305 = vadd.f32 0.0, %v1304
        %v1306 = vpop.f32.mrf.mxu0
        %v1307 = vadd.f32 0.0, %v1306
        %1308 = vmatprep.mubr.f32.mxu0 0.0
        %1309 = vmatmul.mubr.f32.gmra.mxu0 %v433
        %v1310 = vpop.f32.mrf.mxu0
        %v1311 = vadd.f32 0.0, %v1310
        %v1312 = vpop.f32.mrf.mxu0
        %v1313 = vadd.f32 0.0, %v1312
        %1314 = vmatprep.mubr.f32.mxu0 0.0
        %1315 = vmatmul.mubr.f32.gmra.mxu0 %v436
        %v1316 = vpop.f32.mrf.mxu0
        %v1317 = vadd.f32 0.0, %v1316
        %v1318 = vpop.f32.mrf.mxu0
        %v1319 = vadd.f32 0.0, %v1318
        %1320 = vmatprep.mubr.f32.mxu0 0.0
        %1321 = vmatmul.mubr.f32.gmra.mxu0 %v439
        %v1322 = vpop.f32.mrf.mxu0
        %v1323 = vadd.f32 0.0, %v1322
        %v1324 = vpop.f32.mrf.mxu0
        %v1325 = vadd.f32 0.0, %v1324
        %1326 = vmatprep.mubr.f32.mxu0 0.0
        %1327 = vmatmul.mubr.f32.gmra.mxu0 %v442
        %v1328 = vpop.f32.mrf.mxu0
        %v1329 = vadd.f32 0.0, %v1328
        %v1330 = vpop.f32.mrf.mxu0
        %v1331 = vadd.f32 0.0, %v1330
        %1332 = vmatprep.mubr.f32.mxu0 0.0
        %1333 = vmatmul.mubr.f32.gmra.mxu0 %v445
        %v1334 = vpop.f32.mrf.mxu0
        %v1335 = vadd.f32 0.0, %v1334
        %v1336 = vpop.f32.mrf.mxu0
        %v1337 = vadd.f32 0.0, %v1336
        %1338 = vmatprep.mubr.f32.mxu0 0.0
        %1339 = vmatmul.mubr.f32.gmra.mxu0 %v448
        %v1340 = vpop.f32.mrf.mxu0
        %v1341 = vadd.f32 0.0, %v1340
        %v1342 = vpop.f32.mrf.mxu0
        %v1343 = vadd.f32 0.0, %v1342
        %1344 = vmatprep.mubr.f32.mxu0 0.0
        %1345 = vmatmul.mubr.f32.gmra.mxu0 %v451
        %v1346 = vpop.f32.mrf.mxu0
        %v1347 = vadd.f32 0.0, %v1346
        %v1348 = vpop.f32.mrf.mxu0
        %v1349 = vadd.f32 0.0, %v1348
        %1350 = vdwg.mxu0
        %v1351 = vand.u32 2147483647, %v151
        %v1352 = vsub.f32 1.0, %v1351
        %v1353 = vmax.f32 %v1352, 0.0
        %v1355 = vlaneseq
        %v1356 = vshrl.u32 %v1355, 7
        %v1357 = vsub.s32 0, %v1356
        %v1358 = vrot.slane %v1353, %v1357
        %v1359 = vlaneseq
        %v1360 = vshrl.u32 %v1359, 7
        %v1361 = vsub.s32 1, %v1360
        %v1362 = vrot.slane %v1353, %v1361
        %v1363 = vlaneseq
        %v1364 = vshrl.u32 %v1363, 7
        %v1365 = vsub.s32 2, %v1364
        %v1366 = vrot.slane %v1353, %v1365
        %v1367 = vlaneseq
        %v1368 = vshrl.u32 %v1367, 7
        %v1369 = vsub.s32 3, %v1368
        %v1370 = vrot.slane %v1353, %v1369
        %v1375 = vmul.f32 %v520, %v1358
        %v1376 = vmul.f32 %v522, %v1362
        %v1377 = vmul.f32 %v969, %v1366
        %v1378 = vmul.f32 %v971, %v1370
        %v1379 = vmul.f32 %v526, %v1358
        %v1380 = vmul.f32 %v528, %v1362
        %v1381 = vmul.f32 %v975, %v1366
        %v1382 = vmul.f32 %v977, %v1370
        %v1383 = vmul.f32 %v532, %v1358
        %v1384 = vmul.f32 %v534, %v1362
        %v1385 = vmul.f32 %v981, %v1366
        %v1386 = vmul.f32 %v983, %v1370
        %v1387 = vmul.f32 %v538, %v1358
        %v1388 = vmul.f32 %v540, %v1362
        %v1389 = vmul.f32 %v987, %v1366
        %v1390 = vmul.f32 %v989, %v1370
        %v1391 = vmul.f32 %v544, %v1358
        %v1392 = vmul.f32 %v546, %v1362
        %v1393 = vmul.f32 %v993, %v1366
        %v1394 = vmul.f32 %v995, %v1370
        %v1395 = vmul.f32 %v550, %v1358
        %v1396 = vmul.f32 %v552, %v1362
        %v1397 = vmul.f32 %v999, %v1366
        %v1398 = vmul.f32 %v1001, %v1370
        %v1399 = vmul.f32 %v556, %v1358
        %v1400 = vmul.f32 %v558, %v1362
        %v1401 = vmul.f32 %v1005, %v1366
        %v1402 = vmul.f32 %v1007, %v1370
        %v1403 = vmul.f32 %v562, %v1358
        %v1404 = vmul.f32 %v564, %v1362
        %v1405 = vmul.f32 %v1011, %v1366
        %v1406 = vmul.f32 %v1013, %v1370
        %v1407 = vsub.f32 %v151, 1.0
        %v1408 = vand.u32 2147483647, %v1407
        %v1409 = vsub.f32 1.0, %v1408
        %v1410 = vmax.f32 %v1409, 0.0
        %v1412 = vlaneseq
        %v1413 = vshrl.u32 %v1412, 7
        %v1414 = vsub.s32 0, %v1413
        %v1415 = vrot.slane %v1410, %v1414
        %v1416 = vlaneseq
        %v1417 = vshrl.u32 %v1416, 7
        %v1418 = vsub.s32 1, %v1417
        %v1419 = vrot.slane %v1410, %v1418
        %v1420 = vlaneseq
        %v1421 = vshrl.u32 %v1420, 7
        %v1422 = vsub.s32 2, %v1421
        %v1423 = vrot.slane %v1410, %v1422
        %v1424 = vlaneseq
        %v1425 = vshrl.u32 %v1424, 7
        %v1426 = vsub.s32 3, %v1425
        %v1427 = vrot.slane %v1410, %v1426
        %v1432 = vmul.f32 %v568, %v1415
        %v1433 = vmul.f32 %v570, %v1419
        %v1434 = vmul.f32 %v1017, %v1423
        %v1435 = vmul.f32 %v1019, %v1427
        %v1436 = vmul.f32 %v574, %v1415
        %v1437 = vmul.f32 %v576, %v1419
        %v1438 = vmul.f32 %v1023, %v1423
        %v1439 = vmul.f32 %v1025, %v1427
        %v1440 = vmul.f32 %v580, %v1415
        %v1441 = vmul.f32 %v582, %v1419
        %v1442 = vmul.f32 %v1029, %v1423
        %v1443 = vmul.f32 %v1031, %v1427
        %v1444 = vmul.f32 %v586, %v1415
        %v1445 = vmul.f32 %v588, %v1419
        %v1446 = vmul.f32 %v1035, %v1423
        %v1447 = vmul.f32 %v1037, %v1427
        %v1448 = vmul.f32 %v592, %v1415
        %v1449 = vmul.f32 %v594, %v1419
        %v1450 = vmul.f32 %v1041, %v1423
        %v1451 = vmul.f32 %v1043, %v1427
        %v1452 = vmul.f32 %v598, %v1415
        %v1453 = vmul.f32 %v600, %v1419
        %v1454 = vmul.f32 %v1047, %v1423
        %v1455 = vmul.f32 %v1049, %v1427
        %v1456 = vmul.f32 %v604, %v1415
        %v1457 = vmul.f32 %v606, %v1419
        %v1458 = vmul.f32 %v1053, %v1423
        %v1459 = vmul.f32 %v1055, %v1427
        %v1460 = vmul.f32 %v610, %v1415
        %v1461 = vmul.f32 %v612, %v1419
        %v1462 = vmul.f32 %v1059, %v1423
        %v1463 = vmul.f32 %v1061, %v1427
        %v1464 = vadd.f32 %v1375, %v1432
        %v1465 = vadd.f32 %v1376, %v1433
        %v1466 = vadd.f32 %v1377, %v1434
        %v1467 = vadd.f32 %v1378, %v1435
        %v1468 = vadd.f32 %v1379, %v1436
        %v1469 = vadd.f32 %v1380, %v1437
        %v1470 = vadd.f32 %v1381, %v1438
        %v1471 = vadd.f32 %v1382, %v1439
        %v1472 = vadd.f32 %v1383, %v1440
        %v1473 = vadd.f32 %v1384, %v1441
        %v1474 = vadd.f32 %v1385, %v1442
        %v1475 = vadd.f32 %v1386, %v1443
        %v1476 = vadd.f32 %v1387, %v1444
        %v1477 = vadd.f32 %v1388, %v1445
        %v1478 = vadd.f32 %v1389, %v1446
        %v1479 = vadd.f32 %v1390, %v1447
        %v1480 = vadd.f32 %v1391, %v1448
        %v1481 = vadd.f32 %v1392, %v1449
        %v1482 = vadd.f32 %v1393, %v1450
        %v1483 = vadd.f32 %v1394, %v1451
        %v1484 = vadd.f32 %v1395, %v1452
        %v1485 = vadd.f32 %v1396, %v1453
        %v1486 = vadd.f32 %v1397, %v1454
        %v1487 = vadd.f32 %v1398, %v1455
        %v1488 = vadd.f32 %v1399, %v1456
        %v1489 = vadd.f32 %v1400, %v1457
        %v1490 = vadd.f32 %v1401, %v1458
        %v1491 = vadd.f32 %v1402, %v1459
        %v1492 = vadd.f32 %v1403, %v1460
        %v1493 = vadd.f32 %v1404, %v1461
        %v1494 = vadd.f32 %v1405, %v1462
        %v1495 = vadd.f32 %v1406, %v1463
        %v1496 = vsub.f32 %v151, 2.0
        %v1497 = vand.u32 2147483647, %v1496
        %v1498 = vsub.f32 1.0, %v1497
        %v1499 = vmax.f32 %v1498, 0.0
        %v1501 = vlaneseq
        %v1502 = vshrl.u32 %v1501, 7
        %v1503 = vsub.s32 0, %v1502
        %v1504 = vrot.slane %v1499, %v1503
        %v1505 = vlaneseq
        %v1506 = vshrl.u32 %v1505, 7
        %v1507 = vsub.s32 1, %v1506
        %v1508 = vrot.slane %v1499, %v1507
        %v1509 = vlaneseq
        %v1510 = vshrl.u32 %v1509, 7
        %v1511 = vsub.s32 2, %v1510
        %v1512 = vrot.slane %v1499, %v1511
        %v1513 = vlaneseq
        %v1514 = vshrl.u32 %v1513, 7
        %v1515 = vsub.s32 3, %v1514
        %v1516 = vrot.slane %v1499, %v1515
        %v1521 = vmul.f32 %v616, %v1504
        %v1522 = vmul.f32 %v618, %v1508
        %v1523 = vmul.f32 %v1065, %v1512
        %v1524 = vmul.f32 %v1067, %v1516
        %v1525 = vmul.f32 %v622, %v1504
        %v1526 = vmul.f32 %v624, %v1508
        %v1527 = vmul.f32 %v1071, %v1512
        %v1528 = vmul.f32 %v1073, %v1516
        %v1529 = vmul.f32 %v628, %v1504
        %v1530 = vmul.f32 %v630, %v1508
        %v1531 = vmul.f32 %v1077, %v1512
        %v1532 = vmul.f32 %v1079, %v1516
        %v1533 = vmul.f32 %v634, %v1504
        %v1534 = vmul.f32 %v636, %v1508
        %v1535 = vmul.f32 %v1083, %v1512
        %v1536 = vmul.f32 %v1085, %v1516
        %v1537 = vmul.f32 %v640, %v1504
        %v1538 = vmul.f32 %v642, %v1508
        %v1539 = vmul.f32 %v1089, %v1512
        %v1540 = vmul.f32 %v1091, %v1516
        %v1541 = vmul.f32 %v646, %v1504
        %v1542 = vmul.f32 %v648, %v1508
        %v1543 = vmul.f32 %v1095, %v1512
        %v1544 = vmul.f32 %v1097, %v1516
        %v1545 = vmul.f32 %v652, %v1504
        %v1546 = vmul.f32 %v654, %v1508
        %v1547 = vmul.f32 %v1101, %v1512
        %v1548 = vmul.f32 %v1103, %v1516
        %v1549 = vmul.f32 %v658, %v1504
        %v1550 = vmul.f32 %v660, %v1508
        %v1551 = vmul.f32 %v1107, %v1512
        %v1552 = vmul.f32 %v1109, %v1516
        %v1553 = vadd.f32 %v1464, %v1521
        %v1554 = vadd.f32 %v1465, %v1522
        %v1555 = vadd.f32 %v1466, %v1523
        %v1556 = vadd.f32 %v1467, %v1524
        %v1557 = vadd.f32 %v1468, %v1525
        %v1558 = vadd.f32 %v1469, %v1526
        %v1559 = vadd.f32 %v1470, %v1527
        %v1560 = vadd.f32 %v1471, %v1528
        %v1561 = vadd.f32 %v1472, %v1529
        %v1562 = vadd.f32 %v1473, %v1530
        %v1563 = vadd.f32 %v1474, %v1531
        %v1564 = vadd.f32 %v1475, %v1532
        %v1565 = vadd.f32 %v1476, %v1533
        %v1566 = vadd.f32 %v1477, %v1534
        %v1567 = vadd.f32 %v1478, %v1535
        %v1568 = vadd.f32 %v1479, %v1536
        %v1569 = vadd.f32 %v1480, %v1537
        %v1570 = vadd.f32 %v1481, %v1538
        %v1571 = vadd.f32 %v1482, %v1539
        %v1572 = vadd.f32 %v1483, %v1540
        %v1573 = vadd.f32 %v1484, %v1541
        %v1574 = vadd.f32 %v1485, %v1542
        %v1575 = vadd.f32 %v1486, %v1543
        %v1576 = vadd.f32 %v1487, %v1544
        %v1577 = vadd.f32 %v1488, %v1545
        %v1578 = vadd.f32 %v1489, %v1546
        %v1579 = vadd.f32 %v1490, %v1547
        %v1580 = vadd.f32 %v1491, %v1548
        %v1581 = vadd.f32 %v1492, %v1549
        %v1582 = vadd.f32 %v1493, %v1550
        %v1583 = vadd.f32 %v1494, %v1551
        %v1584 = vadd.f32 %v1495, %v1552
        %v1585 = vsub.f32 %v151, 3.0
        %v1586 = vand.u32 2147483647, %v1585
        %v1587 = vsub.f32 1.0, %v1586
        %v1588 = vmax.f32 %v1587, 0.0
        %v1590 = vlaneseq
        %v1591 = vshrl.u32 %v1590, 7
        %v1592 = vsub.s32 0, %v1591
        %v1593 = vrot.slane %v1588, %v1592
        %v1594 = vlaneseq
        %v1595 = vshrl.u32 %v1594, 7
        %v1596 = vsub.s32 1, %v1595
        %v1597 = vrot.slane %v1588, %v1596
        %v1598 = vlaneseq
        %v1599 = vshrl.u32 %v1598, 7
        %v1600 = vsub.s32 2, %v1599
        %v1601 = vrot.slane %v1588, %v1600
        %v1602 = vlaneseq
        %v1603 = vshrl.u32 %v1602, 7
        %v1604 = vsub.s32 3, %v1603
        %v1605 = vrot.slane %v1588, %v1604
        %v1610 = vmul.f32 %v664, %v1593
        %v1611 = vmul.f32 %v666, %v1597
        %v1612 = vmul.f32 %v1113, %v1601
        %v1613 = vmul.f32 %v1115, %v1605
        %v1614 = vmul.f32 %v670, %v1593
        %v1615 = vmul.f32 %v672, %v1597
        %v1616 = vmul.f32 %v1119, %v1601
        %v1617 = vmul.f32 %v1121, %v1605
        %v1618 = vmul.f32 %v676, %v1593
        %v1619 = vmul.f32 %v678, %v1597
        %v1620 = vmul.f32 %v1125, %v1601
        %v1621 = vmul.f32 %v1127, %v1605
        %v1622 = vmul.f32 %v682, %v1593
        %v1623 = vmul.f32 %v684, %v1597
        %v1624 = vmul.f32 %v1131, %v1601
        %v1625 = vmul.f32 %v1133, %v1605
        %v1626 = vmul.f32 %v688, %v1593
        %v1627 = vmul.f32 %v690, %v1597
        %v1628 = vmul.f32 %v1137, %v1601
        %v1629 = vmul.f32 %v1139, %v1605
        %v1630 = vmul.f32 %v694, %v1593
        %v1631 = vmul.f32 %v696, %v1597
        %v1632 = vmul.f32 %v1143, %v1601
        %v1633 = vmul.f32 %v1145, %v1605
        %v1634 = vmul.f32 %v700, %v1593
        %v1635 = vmul.f32 %v702, %v1597
        %v1636 = vmul.f32 %v1149, %v1601
        %v1637 = vmul.f32 %v1151, %v1605
        %v1638 = vmul.f32 %v706, %v1593
        %v1639 = vmul.f32 %v708, %v1597
        %v1640 = vmul.f32 %v1155, %v1601
        %v1641 = vmul.f32 %v1157, %v1605
        %v1642 = vadd.f32 %v1553, %v1610
        %v1643 = vadd.f32 %v1554, %v1611
        %v1644 = vadd.f32 %v1555, %v1612
        %v1645 = vadd.f32 %v1556, %v1613
        %v1646 = vadd.f32 %v1557, %v1614
        %v1647 = vadd.f32 %v1558, %v1615
        %v1648 = vadd.f32 %v1559, %v1616
        %v1649 = vadd.f32 %v1560, %v1617
        %v1650 = vadd.f32 %v1561, %v1618
        %v1651 = vadd.f32 %v1562, %v1619
        %v1652 = vadd.f32 %v1563, %v1620
        %v1653 = vadd.f32 %v1564, %v1621
        %v1654 = vadd.f32 %v1565, %v1622
        %v1655 = vadd.f32 %v1566, %v1623
        %v1656 = vadd.f32 %v1567, %v1624
        %v1657 = vadd.f32 %v1568, %v1625
        %v1658 = vadd.f32 %v1569, %v1626
        %v1659 = vadd.f32 %v1570, %v1627
        %v1660 = vadd.f32 %v1571, %v1628
        %v1661 = vadd.f32 %v1572, %v1629
        %v1662 = vadd.f32 %v1573, %v1630
        %v1663 = vadd.f32 %v1574, %v1631
        %v1664 = vadd.f32 %v1575, %v1632
        %v1665 = vadd.f32 %v1576, %v1633
        %v1666 = vadd.f32 %v1577, %v1634
        %v1667 = vadd.f32 %v1578, %v1635
        %v1668 = vadd.f32 %v1579, %v1636
        %v1669 = vadd.f32 %v1580, %v1637
        %v1670 = vadd.f32 %v1581, %v1638
        %v1671 = vadd.f32 %v1582, %v1639
        %v1672 = vadd.f32 %v1583, %v1640
        %v1673 = vadd.f32 %v1584, %v1641
        %v1674 = vsub.f32 %v151, 4.0
        %v1675 = vand.u32 2147483647, %v1674
        %v1676 = vsub.f32 1.0, %v1675
        %v1677 = vmax.f32 %v1676, 0.0
        %v1679 = vlaneseq
        %v1680 = vshrl.u32 %v1679, 7
        %v1681 = vsub.s32 0, %v1680
        %v1682 = vrot.slane %v1677, %v1681
        %v1683 = vlaneseq
        %v1684 = vshrl.u32 %v1683, 7
        %v1685 = vsub.s32 1, %v1684
        %v1686 = vrot.slane %v1677, %v1685
        %v1687 = vlaneseq
        %v1688 = vshrl.u32 %v1687, 7
        %v1689 = vsub.s32 2, %v1688
        %v1690 = vrot.slane %v1677, %v1689
        %v1691 = vlaneseq
        %v1692 = vshrl.u32 %v1691, 7
        %v1693 = vsub.s32 3, %v1692
        %v1694 = vrot.slane %v1677, %v1693
        %v1699 = vmul.f32 %v712, %v1682
        %v1700 = vmul.f32 %v714, %v1686
        %v1701 = vmul.f32 %v1161, %v1690
        %v1702 = vmul.f32 %v1163, %v1694
        %v1703 = vmul.f32 %v718, %v1682
        %v1704 = vmul.f32 %v720, %v1686
        %v1705 = vmul.f32 %v1167, %v1690
        %v1706 = vmul.f32 %v1169, %v1694
        %v1707 = vmul.f32 %v724, %v1682
        %v1708 = vmul.f32 %v726, %v1686
        %v1709 = vmul.f32 %v1173, %v1690
        %v1710 = vmul.f32 %v1175, %v1694
        %v1711 = vmul.f32 %v730, %v1682
        %v1712 = vmul.f32 %v732, %v1686
        %v1713 = vmul.f32 %v1179, %v1690
        %v1714 = vmul.f32 %v1181, %v1694
        %v1715 = vmul.f32 %v736, %v1682
        %v1716 = vmul.f32 %v738, %v1686
        %v1717 = vmul.f32 %v1185, %v1690
        %v1718 = vmul.f32 %v1187, %v1694
        %v1719 = vmul.f32 %v742, %v1682
        %v1720 = vmul.f32 %v744, %v1686
        %v1721 = vmul.f32 %v1191, %v1690
        %v1722 = vmul.f32 %v1193, %v1694
        %v1723 = vmul.f32 %v748, %v1682
        %v1724 = vmul.f32 %v750, %v1686
        %v1725 = vmul.f32 %v1197, %v1690
        %v1726 = vmul.f32 %v1199, %v1694
        %v1727 = vmul.f32 %v754, %v1682
        %v1728 = vmul.f32 %v756, %v1686
        %v1729 = vmul.f32 %v1203, %v1690
        %v1730 = vmul.f32 %v1205, %v1694
        %v1731 = vadd.f32 %v1642, %v1699
        %v1732 = vadd.f32 %v1643, %v1700
        %v1733 = vadd.f32 %v1644, %v1701
        %v1734 = vadd.f32 %v1645, %v1702
        %v1735 = vadd.f32 %v1646, %v1703
        %v1736 = vadd.f32 %v1647, %v1704
        %v1737 = vadd.f32 %v1648, %v1705
        %v1738 = vadd.f32 %v1649, %v1706
        %v1739 = vadd.f32 %v1650, %v1707
        %v1740 = vadd.f32 %v1651, %v1708
        %v1741 = vadd.f32 %v1652, %v1709
        %v1742 = vadd.f32 %v1653, %v1710
        %v1743 = vadd.f32 %v1654, %v1711
        %v1744 = vadd.f32 %v1655, %v1712
        %v1745 = vadd.f32 %v1656, %v1713
        %v1746 = vadd.f32 %v1657, %v1714
        %v1747 = vadd.f32 %v1658, %v1715
        %v1748 = vadd.f32 %v1659, %v1716
        %v1749 = vadd.f32 %v1660, %v1717
        %v1750 = vadd.f32 %v1661, %v1718
        %v1751 = vadd.f32 %v1662, %v1719
        %v1752 = vadd.f32 %v1663, %v1720
        %v1753 = vadd.f32 %v1664, %v1721
        %v1754 = vadd.f32 %v1665, %v1722
        %v1755 = vadd.f32 %v1666, %v1723
        %v1756 = vadd.f32 %v1667, %v1724
        %v1757 = vadd.f32 %v1668, %v1725
        %v1758 = vadd.f32 %v1669, %v1726
        %v1759 = vadd.f32 %v1670, %v1727
        %v1760 = vadd.f32 %v1671, %v1728
        %v1761 = vadd.f32 %v1672, %v1729
        %v1762 = vadd.f32 %v1673, %v1730
        %v1763 = vsub.f32 %v151, 5.0
        %v1764 = vand.u32 2147483647, %v1763
        %v1765 = vsub.f32 1.0, %v1764
        %v1766 = vmax.f32 %v1765, 0.0
        %v1768 = vlaneseq
        %v1769 = vshrl.u32 %v1768, 7
        %v1770 = vsub.s32 0, %v1769
        %v1771 = vrot.slane %v1766, %v1770
        %v1772 = vlaneseq
        %v1773 = vshrl.u32 %v1772, 7
        %v1774 = vsub.s32 1, %v1773
        %v1775 = vrot.slane %v1766, %v1774
        %v1776 = vlaneseq
        %v1777 = vshrl.u32 %v1776, 7
        %v1778 = vsub.s32 2, %v1777
        %v1779 = vrot.slane %v1766, %v1778
        %v1780 = vlaneseq
        %v1781 = vshrl.u32 %v1780, 7
        %v1782 = vsub.s32 3, %v1781
        %v1783 = vrot.slane %v1766, %v1782
        %v1788 = vmul.f32 %v760, %v1771
        %v1789 = vmul.f32 %v762, %v1775
        %v1790 = vmul.f32 %v1209, %v1779
        %v1791 = vmul.f32 %v1211, %v1783
        %v1792 = vmul.f32 %v766, %v1771
        %v1793 = vmul.f32 %v768, %v1775
        %v1794 = vmul.f32 %v1215, %v1779
        %v1795 = vmul.f32 %v1217, %v1783
        %v1796 = vmul.f32 %v772, %v1771
        %v1797 = vmul.f32 %v774, %v1775
        %v1798 = vmul.f32 %v1221, %v1779
        %v1799 = vmul.f32 %v1223, %v1783
        %v1800 = vmul.f32 %v778, %v1771
        %v1801 = vmul.f32 %v780, %v1775
        %v1802 = vmul.f32 %v1227, %v1779
        %v1803 = vmul.f32 %v1229, %v1783
        %v1804 = vmul.f32 %v784, %v1771
        %v1805 = vmul.f32 %v786, %v1775
        %v1806 = vmul.f32 %v1233, %v1779
        %v1807 = vmul.f32 %v1235, %v1783
        %v1808 = vmul.f32 %v790, %v1771
        %v1809 = vmul.f32 %v792, %v1775
        %v1810 = vmul.f32 %v1239, %v1779
        %v1811 = vmul.f32 %v1241, %v1783
        %v1812 = vmul.f32 %v796, %v1771
        %v1813 = vmul.f32 %v798, %v1775
        %v1814 = vmul.f32 %v1245, %v1779
        %v1815 = vmul.f32 %v1247, %v1783
        %v1816 = vmul.f32 %v802, %v1771
        %v1817 = vmul.f32 %v804, %v1775
        %v1818 = vmul.f32 %v1251, %v1779
        %v1819 = vmul.f32 %v1253, %v1783
        %v1820 = vadd.f32 %v1731, %v1788
        %v1821 = vadd.f32 %v1732, %v1789
        %v1822 = vadd.f32 %v1733, %v1790
        %v1823 = vadd.f32 %v1734, %v1791
        %v1824 = vadd.f32 %v1735, %v1792
        %v1825 = vadd.f32 %v1736, %v1793
        %v1826 = vadd.f32 %v1737, %v1794
        %v1827 = vadd.f32 %v1738, %v1795
        %v1828 = vadd.f32 %v1739, %v1796
        %v1829 = vadd.f32 %v1740, %v1797
        %v1830 = vadd.f32 %v1741, %v1798
        %v1831 = vadd.f32 %v1742, %v1799
        %v1832 = vadd.f32 %v1743, %v1800
        %v1833 = vadd.f32 %v1744, %v1801
        %v1834 = vadd.f32 %v1745, %v1802
        %v1835 = vadd.f32 %v1746, %v1803
        %v1836 = vadd.f32 %v1747, %v1804
        %v1837 = vadd.f32 %v1748, %v1805
        %v1838 = vadd.f32 %v1749, %v1806
        %v1839 = vadd.f32 %v1750, %v1807
        %v1840 = vadd.f32 %v1751, %v1808
        %v1841 = vadd.f32 %v1752, %v1809
        %v1842 = vadd.f32 %v1753, %v1810
        %v1843 = vadd.f32 %v1754, %v1811
        %v1844 = vadd.f32 %v1755, %v1812
        %v1845 = vadd.f32 %v1756, %v1813
        %v1846 = vadd.f32 %v1757, %v1814
        %v1847 = vadd.f32 %v1758, %v1815
        %v1848 = vadd.f32 %v1759, %v1816
        %v1849 = vadd.f32 %v1760, %v1817
        %v1850 = vadd.f32 %v1761, %v1818
        %v1851 = vadd.f32 %v1762, %v1819
        %v1852 = vsub.f32 %v151, 6.0
        %v1853 = vand.u32 2147483647, %v1852
        %v1854 = vsub.f32 1.0, %v1853
        %v1855 = vmax.f32 %v1854, 0.0
        %v1857 = vlaneseq
        %v1858 = vshrl.u32 %v1857, 7
        %v1859 = vsub.s32 0, %v1858
        %v1860 = vrot.slane %v1855, %v1859
        %v1861 = vlaneseq
        %v1862 = vshrl.u32 %v1861, 7
        %v1863 = vsub.s32 1, %v1862
        %v1864 = vrot.slane %v1855, %v1863
        %v1865 = vlaneseq
        %v1866 = vshrl.u32 %v1865, 7
        %v1867 = vsub.s32 2, %v1866
        %v1868 = vrot.slane %v1855, %v1867
        %v1869 = vlaneseq
        %v1870 = vshrl.u32 %v1869, 7
        %v1871 = vsub.s32 3, %v1870
        %v1872 = vrot.slane %v1855, %v1871
        %v1877 = vmul.f32 %v808, %v1860
        %v1878 = vmul.f32 %v810, %v1864
        %v1879 = vmul.f32 %v1257, %v1868
        %v1880 = vmul.f32 %v1259, %v1872
        %v1881 = vmul.f32 %v814, %v1860
        %v1882 = vmul.f32 %v816, %v1864
        %v1883 = vmul.f32 %v1263, %v1868
        %v1884 = vmul.f32 %v1265, %v1872
        %v1885 = vmul.f32 %v820, %v1860
        %v1886 = vmul.f32 %v822, %v1864
        %v1887 = vmul.f32 %v1269, %v1868
        %v1888 = vmul.f32 %v1271, %v1872
        %v1889 = vmul.f32 %v826, %v1860
        %v1890 = vmul.f32 %v828, %v1864
        %v1891 = vmul.f32 %v1275, %v1868
        %v1892 = vmul.f32 %v1277, %v1872
        %v1893 = vmul.f32 %v832, %v1860
        %v1894 = vmul.f32 %v834, %v1864
        %v1895 = vmul.f32 %v1281, %v1868
        %v1896 = vmul.f32 %v1283, %v1872
        %v1897 = vmul.f32 %v838, %v1860
        %v1898 = vmul.f32 %v840, %v1864
        %v1899 = vmul.f32 %v1287, %v1868
        %v1900 = vmul.f32 %v1289, %v1872
        %v1901 = vmul.f32 %v844, %v1860
        %v1902 = vmul.f32 %v846, %v1864
        %v1903 = vmul.f32 %v1293, %v1868
        %v1904 = vmul.f32 %v1295, %v1872
        %v1905 = vmul.f32 %v850, %v1860
        %v1906 = vmul.f32 %v852, %v1864
        %v1907 = vmul.f32 %v1299, %v1868
        %v1908 = vmul.f32 %v1301, %v1872
        %v1909 = vadd.f32 %v1820, %v1877
        %v1910 = vadd.f32 %v1821, %v1878
        %v1911 = vadd.f32 %v1822, %v1879
        %v1912 = vadd.f32 %v1823, %v1880
        %v1913 = vadd.f32 %v1824, %v1881
        %v1914 = vadd.f32 %v1825, %v1882
        %v1915 = vadd.f32 %v1826, %v1883
        %v1916 = vadd.f32 %v1827, %v1884
        %v1917 = vadd.f32 %v1828, %v1885
        %v1918 = vadd.f32 %v1829, %v1886
        %v1919 = vadd.f32 %v1830, %v1887
        %v1920 = vadd.f32 %v1831, %v1888
        %v1921 = vadd.f32 %v1832, %v1889
        %v1922 = vadd.f32 %v1833, %v1890
        %v1923 = vadd.f32 %v1834, %v1891
        %v1924 = vadd.f32 %v1835, %v1892
        %v1925 = vadd.f32 %v1836, %v1893
        %v1926 = vadd.f32 %v1837, %v1894
        %v1927 = vadd.f32 %v1838, %v1895
        %v1928 = vadd.f32 %v1839, %v1896
        %v1929 = vadd.f32 %v1840, %v1897
        %v1930 = vadd.f32 %v1841, %v1898
        %v1931 = vadd.f32 %v1842, %v1899
        %v1932 = vadd.f32 %v1843, %v1900
        %v1933 = vadd.f32 %v1844, %v1901
        %v1934 = vadd.f32 %v1845, %v1902
        %v1935 = vadd.f32 %v1846, %v1903
        %v1936 = vadd.f32 %v1847, %v1904
        %v1937 = vadd.f32 %v1848, %v1905
        %v1938 = vadd.f32 %v1849, %v1906
        %v1939 = vadd.f32 %v1850, %v1907
        %v1940 = vadd.f32 %v1851, %v1908
        %v1941 = vsub.f32 %v151, 7.0
        %v1942 = vand.u32 2147483647, %v1941
        %v1943 = vsub.f32 1.0, %v1942
        %v1944 = vmax.f32 %v1943, 0.0
        %v1946 = vlaneseq
        %v1947 = vshrl.u32 %v1946, 7
        %v1948 = vsub.s32 0, %v1947
        %v1949 = vrot.slane %v1944, %v1948
        %v1950 = vlaneseq
        %v1951 = vshrl.u32 %v1950, 7
        %v1952 = vsub.s32 1, %v1951
        %v1953 = vrot.slane %v1944, %v1952
        %v1954 = vlaneseq
        %v1955 = vshrl.u32 %v1954, 7
        %v1956 = vsub.s32 2, %v1955
        %v1957 = vrot.slane %v1944, %v1956
        %v1958 = vlaneseq
        %v1959 = vshrl.u32 %v1958, 7
        %v1960 = vsub.s32 3, %v1959
        %v1961 = vrot.slane %v1944, %v1960
        %v1966 = vmul.f32 %v856, %v1949
        %v1967 = vmul.f32 %v858, %v1953
        %v1968 = vmul.f32 %v1305, %v1957
        %v1969 = vmul.f32 %v1307, %v1961
        %v1970 = vmul.f32 %v862, %v1949
        %v1971 = vmul.f32 %v864, %v1953
        %v1972 = vmul.f32 %v1311, %v1957
        %v1973 = vmul.f32 %v1313, %v1961
        %v1974 = vmul.f32 %v868, %v1949
        %v1975 = vmul.f32 %v870, %v1953
        %v1976 = vmul.f32 %v1317, %v1957
        %v1977 = vmul.f32 %v1319, %v1961
        %v1978 = vmul.f32 %v874, %v1949
        %v1979 = vmul.f32 %v876, %v1953
        %v1980 = vmul.f32 %v1323, %v1957
        %v1981 = vmul.f32 %v1325, %v1961
        %v1982 = vmul.f32 %v880, %v1949
        %v1983 = vmul.f32 %v882, %v1953
        %v1984 = vmul.f32 %v1329, %v1957
        %v1985 = vmul.f32 %v1331, %v1961
        %v1986 = vmul.f32 %v886, %v1949
        %v1987 = vmul.f32 %v888, %v1953
        %v1988 = vmul.f32 %v1335, %v1957
        %v1989 = vmul.f32 %v1337, %v1961
        %v1990 = vmul.f32 %v892, %v1949
        %v1991 = vmul.f32 %v894, %v1953
        %v1992 = vmul.f32 %v1341, %v1957
        %v1993 = vmul.f32 %v1343, %v1961
        %v1994 = vmul.f32 %v898, %v1949
        %v1995 = vmul.f32 %v900, %v1953
        %v1996 = vmul.f32 %v1347, %v1957
        %v1997 = vmul.f32 %v1349, %v1961
        %v1998 = vadd.f32 %v1909, %v1966
        %v1999 = vadd.f32 %v1910, %v1967
        %v2000 = vadd.f32 %v1911, %v1968
        %v2001 = vadd.f32 %v1912, %v1969
        %v2002 = vadd.f32 %v1913, %v1970
        %v2003 = vadd.f32 %v1914, %v1971
        %v2004 = vadd.f32 %v1915, %v1972
        %v2005 = vadd.f32 %v1916, %v1973
        %v2006 = vadd.f32 %v1917, %v1974
        %v2007 = vadd.f32 %v1918, %v1975
        %v2008 = vadd.f32 %v1919, %v1976
        %v2009 = vadd.f32 %v1920, %v1977
        %v2010 = vadd.f32 %v1921, %v1978
        %v2011 = vadd.f32 %v1922, %v1979
        %v2012 = vadd.f32 %v1923, %v1980
        %v2013 = vadd.f32 %v1924, %v1981
        %v2014 = vadd.f32 %v1925, %v1982
        %v2015 = vadd.f32 %v1926, %v1983
        %v2016 = vadd.f32 %v1927, %v1984
        %v2017 = vadd.f32 %v1928, %v1985
        %v2018 = vadd.f32 %v1929, %v1986
        %v2019 = vadd.f32 %v1930, %v1987
        %v2020 = vadd.f32 %v1931, %v1988
        %v2021 = vadd.f32 %v1932, %v1989
        %v2022 = vadd.f32 %v1933, %v1990
        %v2023 = vadd.f32 %v1934, %v1991
        %v2024 = vadd.f32 %v1935, %v1992
        %v2025 = vadd.f32 %v1936, %v1993
        %v2026 = vadd.f32 %v1937, %v1994
        %v2027 = vadd.f32 %v1938, %v1995
        %v2028 = vadd.f32 %v1939, %v1996
        %v2029 = vadd.f32 %v1940, %v1997
        %v2030 = vand.u32 2147483647, %v147
        %v2031 = vsub.f32 1.0, %v2030
        %v2032 = vmax.f32 %v2031, 0.0
        %v2034 = vlaneseq
        %v2035 = vshrl.u32 %v2034, 7
        %v2036 = vsub.s32 0, %v2035
        %v2037 = vrot.slane %v2032, %v2036
        %v2038 = vlaneseq
        %v2039 = vshrl.u32 %v2038, 7
        %v2040 = vsub.s32 1, %v2039
        %v2041 = vrot.slane %v2032, %v2040
        %v2042 = vlaneseq
        %v2043 = vshrl.u32 %v2042, 7
        %v2044 = vsub.s32 2, %v2043
        %v2045 = vrot.slane %v2032, %v2044
        %v2046 = vlaneseq
        %v2047 = vshrl.u32 %v2046, 7
        %v2048 = vsub.s32 3, %v2047
        %v2049 = vrot.slane %v2032, %v2048
        %v2054 = vmul.f32 %v1998, %v2037
        %v2055 = vmul.f32 %v1999, %v2041
        %v2056 = vmul.f32 %v2000, %v2045
        %v2057 = vmul.f32 %v2001, %v2049
        %v2058 = vsub.f32 %v147, 1.0
        %v2059 = vand.u32 2147483647, %v2058
        %v2060 = vsub.f32 1.0, %v2059
        %v2061 = vmax.f32 %v2060, 0.0
        %v2063 = vlaneseq
        %v2064 = vshrl.u32 %v2063, 7
        %v2065 = vsub.s32 0, %v2064
        %v2066 = vrot.slane %v2061, %v2065
        %v2067 = vlaneseq
        %v2068 = vshrl.u32 %v2067, 7
        %v2069 = vsub.s32 1, %v2068
        %v2070 = vrot.slane %v2061, %v2069
        %v2071 = vlaneseq
        %v2072 = vshrl.u32 %v2071, 7
        %v2073 = vsub.s32 2, %v2072
        %v2074 = vrot.slane %v2061, %v2073
        %v2075 = vlaneseq
        %v2076 = vshrl.u32 %v2075, 7
        %v2077 = vsub.s32 3, %v2076
        %v2078 = vrot.slane %v2061, %v2077
        %v2083 = vmul.f32 %v2002, %v2066
        %v2084 = vmul.f32 %v2003, %v2070
        %v2085 = vmul.f32 %v2004, %v2074
        %v2086 = vmul.f32 %v2005, %v2078
        %v2087 = vadd.f32 %v2054, %v2083
        %v2088 = vadd.f32 %v2055, %v2084
        %v2089 = vadd.f32 %v2056, %v2085
        %v2090 = vadd.f32 %v2057, %v2086
        %v2091 = vsub.f32 %v147, 2.0
        %v2092 = vand.u32 2147483647, %v2091
        %v2093 = vsub.f32 1.0, %v2092
        %v2094 = vmax.f32 %v2093, 0.0
        %v2096 = vlaneseq
        %v2097 = vshrl.u32 %v2096, 7
        %v2098 = vsub.s32 0, %v2097
        %v2099 = vrot.slane %v2094, %v2098
        %v2100 = vlaneseq
        %v2101 = vshrl.u32 %v2100, 7
        %v2102 = vsub.s32 1, %v2101
        %v2103 = vrot.slane %v2094, %v2102
        %v2104 = vlaneseq
        %v2105 = vshrl.u32 %v2104, 7
        %v2106 = vsub.s32 2, %v2105
        %v2107 = vrot.slane %v2094, %v2106
        %v2108 = vlaneseq
        %v2109 = vshrl.u32 %v2108, 7
        %v2110 = vsub.s32 3, %v2109
        %v2111 = vrot.slane %v2094, %v2110
        %v2116 = vmul.f32 %v2006, %v2099
        %v2117 = vmul.f32 %v2007, %v2103
        %v2118 = vmul.f32 %v2008, %v2107
        %v2119 = vmul.f32 %v2009, %v2111
        %v2120 = vadd.f32 %v2087, %v2116
        %v2121 = vadd.f32 %v2088, %v2117
        %v2122 = vadd.f32 %v2089, %v2118
        %v2123 = vadd.f32 %v2090, %v2119
        %v2124 = vsub.f32 %v147, 3.0
        %v2125 = vand.u32 2147483647, %v2124
        %v2126 = vsub.f32 1.0, %v2125
        %v2127 = vmax.f32 %v2126, 0.0
        %v2129 = vlaneseq
        %v2130 = vshrl.u32 %v2129, 7
        %v2131 = vsub.s32 0, %v2130
        %v2132 = vrot.slane %v2127, %v2131
        %v2133 = vlaneseq
        %v2134 = vshrl.u32 %v2133, 7
        %v2135 = vsub.s32 1, %v2134
        %v2136 = vrot.slane %v2127, %v2135
        %v2137 = vlaneseq
        %v2138 = vshrl.u32 %v2137, 7
        %v2139 = vsub.s32 2, %v2138
        %v2140 = vrot.slane %v2127, %v2139
        %v2141 = vlaneseq
        %v2142 = vshrl.u32 %v2141, 7
        %v2143 = vsub.s32 3, %v2142
        %v2144 = vrot.slane %v2127, %v2143
        %v2149 = vmul.f32 %v2010, %v2132
        %v2150 = vmul.f32 %v2011, %v2136
        %v2151 = vmul.f32 %v2012, %v2140
        %v2152 = vmul.f32 %v2013, %v2144
        %v2153 = vadd.f32 %v2120, %v2149
        %v2154 = vadd.f32 %v2121, %v2150
        %v2155 = vadd.f32 %v2122, %v2151
        %v2156 = vadd.f32 %v2123, %v2152
        %v2157 = vsub.f32 %v147, 4.0
        %v2158 = vand.u32 2147483647, %v2157
        %v2159 = vsub.f32 1.0, %v2158
        %v2160 = vmax.f32 %v2159, 0.0
        %v2162 = vlaneseq
        %v2163 = vshrl.u32 %v2162, 7
        %v2164 = vsub.s32 0, %v2163
        %v2165 = vrot.slane %v2160, %v2164
        %v2166 = vlaneseq
        %v2167 = vshrl.u32 %v2166, 7
        %v2168 = vsub.s32 1, %v2167
        %v2169 = vrot.slane %v2160, %v2168
        %v2170 = vlaneseq
        %v2171 = vshrl.u32 %v2170, 7
        %v2172 = vsub.s32 2, %v2171
        %v2173 = vrot.slane %v2160, %v2172
        %v2174 = vlaneseq
        %v2175 = vshrl.u32 %v2174, 7
        %v2176 = vsub.s32 3, %v2175
        %v2177 = vrot.slane %v2160, %v2176
        %v2182 = vmul.f32 %v2014, %v2165
        %v2183 = vmul.f32 %v2015, %v2169
        %v2184 = vmul.f32 %v2016, %v2173
        %v2185 = vmul.f32 %v2017, %v2177
        %v2186 = vadd.f32 %v2153, %v2182
        %v2187 = vadd.f32 %v2154, %v2183
        %v2188 = vadd.f32 %v2155, %v2184
        %v2189 = vadd.f32 %v2156, %v2185
        %v2190 = vsub.f32 %v147, 5.0
        %v2191 = vand.u32 2147483647, %v2190
        %v2192 = vsub.f32 1.0, %v2191
        %v2193 = vmax.f32 %v2192, 0.0
        %v2195 = vlaneseq
        %v2196 = vshrl.u32 %v2195, 7
        %v2197 = vsub.s32 0, %v2196
        %v2198 = vrot.slane %v2193, %v2197
        %v2199 = vlaneseq
        %v2200 = vshrl.u32 %v2199, 7
        %v2201 = vsub.s32 1, %v2200
        %v2202 = vrot.slane %v2193, %v2201
        %v2203 = vlaneseq
        %v2204 = vshrl.u32 %v2203, 7
        %v2205 = vsub.s32 2, %v2204
        %v2206 = vrot.slane %v2193, %v2205
        %v2207 = vlaneseq
        %v2208 = vshrl.u32 %v2207, 7
        %v2209 = vsub.s32 3, %v2208
        %v2210 = vrot.slane %v2193, %v2209
        %v2215 = vmul.f32 %v2018, %v2198
        %v2216 = vmul.f32 %v2019, %v2202
        %v2217 = vmul.f32 %v2020, %v2206
        %v2218 = vmul.f32 %v2021, %v2210
        %v2219 = vadd.f32 %v2186, %v2215
        %v2220 = vadd.f32 %v2187, %v2216
        %v2221 = vadd.f32 %v2188, %v2217
        %v2222 = vadd.f32 %v2189, %v2218
        %v2223 = vsub.f32 %v147, 6.0
        %v2224 = vand.u32 2147483647, %v2223
        %v2225 = vsub.f32 1.0, %v2224
        %v2226 = vmax.f32 %v2225, 0.0
        %v2228 = vlaneseq
        %v2229 = vshrl.u32 %v2228, 7
        %v2230 = vsub.s32 0, %v2229
        %v2231 = vrot.slane %v2226, %v2230
        %v2232 = vlaneseq
        %v2233 = vshrl.u32 %v2232, 7
        %v2234 = vsub.s32 1, %v2233
        %v2235 = vrot.slane %v2226, %v2234
        %v2236 = vlaneseq
        %v2237 = vshrl.u32 %v2236, 7
        %v2238 = vsub.s32 2, %v2237
        %v2239 = vrot.slane %v2226, %v2238
        %v2240 = vlaneseq
        %v2241 = vshrl.u32 %v2240, 7
        %v2242 = vsub.s32 3, %v2241
        %v2243 = vrot.slane %v2226, %v2242
        %v2248 = vmul.f32 %v2022, %v2231
        %v2249 = vmul.f32 %v2023, %v2235
        %v2250 = vmul.f32 %v2024, %v2239
        %v2251 = vmul.f32 %v2025, %v2243
        %v2252 = vadd.f32 %v2219, %v2248
        %v2253 = vadd.f32 %v2220, %v2249
        %v2254 = vadd.f32 %v2221, %v2250
        %v2255 = vadd.f32 %v2222, %v2251
        %v2256 = vsub.f32 %v147, 7.0
        %v2257 = vand.u32 2147483647, %v2256
        %v2258 = vsub.f32 1.0, %v2257
        %v2259 = vmax.f32 %v2258, 0.0
        %v2261 = vlaneseq
        %v2262 = vshrl.u32 %v2261, 7
        %v2263 = vsub.s32 0, %v2262
        %v2264 = vrot.slane %v2259, %v2263
        %v2265 = vlaneseq
        %v2266 = vshrl.u32 %v2265, 7
        %v2267 = vsub.s32 1, %v2266
        %v2268 = vrot.slane %v2259, %v2267
        %v2269 = vlaneseq
        %v2270 = vshrl.u32 %v2269, 7
        %v2271 = vsub.s32 2, %v2270
        %v2272 = vrot.slane %v2259, %v2271
        %v2273 = vlaneseq
        %v2274 = vshrl.u32 %v2273, 7
        %v2275 = vsub.s32 3, %v2274
        %v2276 = vrot.slane %v2259, %v2275
        %v2281 = vmul.f32 %v2026, %v2264
        %v2282 = vmul.f32 %v2027, %v2268
        %v2283 = vmul.f32 %v2028, %v2272
        %v2284 = vmul.f32 %v2029, %v2276
        %v2285 = vadd.f32 %v2252, %v2281
        %v2286 = vadd.f32 %v2253, %v2282
        %v2287 = vadd.f32 %v2254, %v2283
        %v2288 = vadd.f32 %v2255, %v2284
        %2289 = vst [vmem:[%s137] sm:$0xff] %v2285
        %2290 = vst [vmem:[%s137 + $0x8] sm:$0xff] %v2286
        %2291 = vst [vmem:[%s137 + $0x10] sm:$0xff] %v2287
        %2292 = vst [vmem:[%s137 + $0x18] sm:$0xff] %v2288
        %s2293 = sand.u32 %s71, 1
        %s2294 = scalar_lea.sflag [#allocation3], %s2293
        %s2295 = sand.u32 %s71, 1
        %s2296 = smul.addr %s2295, 32
        %s2297 = scalar_lea.vmem [#allocation2], %s2296
        // Predicated region
        $region29: #{tpu_custom_call.1} parent=27 // pred_check
          %p2298 = pneg %p81
        $region30: #{tpu_custom_call.1} parent=27 // pred_check_branch
          %2300 = sbr.rel (%p2298) target = $region32
        $region31: #{tpu_custom_call.1} parent=27 // pred_region
          %s2301 = smul.u32 4, %s16
          %s2303 = ssub.s32 512, 512
          %2304 = vsyncadd %s2294, %s2303
          %s2305 = smul.addr %s2301, 128
          %s2306 = scalar_lea.hbm %s2, %s2305
          %s2308 = sshll.u32 %s2297, 4
          %s2309 = int_to_ptr.vmem [resolvable:$true] %s2308
          %2311 = dma.vmem_to_hbm [thread:$0]  %s2309, 512, %s2306, %s2294
        $region32: #{tpu_custom_call.1} parent=27 // pred_fallthru
          _
      $region28: #{tpu_custom_call.1} parent=5 // pred_fallthru
        _
      %p2312 = scmp.le.s32.totalorder 2, %s11
      // Predicated region
      $region33: #{tpu_custom_call.1} parent=5 // pred_check
        %p2313 = pneg %p2312
      $region34: #{tpu_custom_call.1} parent=5 // pred_check_branch
        %2315 = sbr.rel (%p2313) target = $region36
      $region35: #{tpu_custom_call.1} parent=5 // pred_region
        %s2316 = ssub.s32 %s11, 2
        // Predicated region
        $region37: #{tpu_custom_call.1} parent=35 // pred_check
          %p2317 = pneg %p87
        $region38: #{tpu_custom_call.1} parent=35 // pred_check_branch
          %2319 = sbr.rel (%p2317) target = $region40
        $region39: #{tpu_custom_call.1} parent=35 // pred_region
          %s2320 = sand.u32 %s72, 1
          %s2321 = scalar_lea.sflag [#allocation3], %s2320
          %s2322 = sand.u32 %s72, 1
          %s2323 = smul.addr %s2322, 32
          %s2324 = scalar_lea.vmem [#allocation2], %s2323
          %2325 = dma.done %s2321, 512
        $region40: #{tpu_custom_call.1} parent=35 // pred_fallthru
          _
      $region36: #{tpu_custom_call.1} parent=5 // pred_fallthru
        _
    $region6: #{tpu_custom_call.1} parent=1 // loop_footer
      %s15 = sadd.s32 1, %s11
    $region7: #{tpu_custom_call.1} parent=1 // loop_footer_branch
      %10 = sbr.rel target = $region3
    $region8: #{tpu_custom_call.1} parent=1 // loop_exit
      _
    %2326 = vsyncpa [#allocation3], 1
    %s2327 = scalar_lea.sflag [#allocation3], 1
    %2328 = vsyncpa %s2327, 1

</llo_original>
